<compile_context>
chip_gen: v7x
topology: tpu7x:2x2x1
jax: 0.10.0
libtpu: 0.0.40
codegen_flags: <defaults>
</compile_context>

<pallas_src>
import math

import jax
import jax.numpy as jnp
from jax.experimental import pallas as pl
from jax.experimental.pallas import tpu as pltpu


# ---------------------------------------------------------------------------
# Pallas kernel: full SRLSGAT forward for Bt batch images per grid step
# ---------------------------------------------------------------------------
def _fused_srlsgat_kernel(xin_ref, w1_ref, b1_ref, w2_ref, b2_ref, o_ref, mid_ref):
    """All operands live in VMEM for the duration of the grid step.

    xin_ref : (Bt, H+2, W*C1)  H-padded input slabs (last-group channels ++ lms
                               channels), (W, C) merged onto the lane axis, bf16
    w1_ref  : (3, W*C1, W*C2)  banded stage-1 weight (branch+skip fused), per ky
    b1_ref  : (1, W*C2)        stage-1 bias (branch_b + skip_b) tiled along W, f32
    w2_ref  : (3, W*C2, W*C3)  banded final-conv weight, per ky
    b2_ref  : (1, W*C3)        final bias tiled along W, f32
    o_ref   : (Bt, H, W*C3)    lane-dense output slab, f32
    mid_ref : (Bt, H+2, W*C2)  VMEM scratch: H-padded stage-1 result (bf16 handoff)
    """
    bt, H, C3W = o_ref.shape
    C1W = xin_ref.shape[-1]
    C2W = mid_ref.shape[-1]
    M = bt * H  # matmul rows per MXU push (batch folded into M)

    # Zero the H-halo rows of the stage-1 scratch once per pallas_call: the
    # scratch persists across grid iterations and these rows never change.
    @pl.when(pl.program_id(0) == 0)
    def _():
        zrow = jnp.zeros((bt, 1, C2W), dtype=mid_ref.dtype)
        mid_ref[:, 0:1, :] = zrow
        mid_ref[:, H + 1:H + 2, :] = zrow

    # ---- stage 1: branch(x_g) + skip(lms) as 3 banded matmuls (one per ky) ----
    # Seed the accumulator with the broadcast bias (drops a zeros fill + add).
    acc1 = jnp.broadcast_to(b1_ref[...], (M, C2W)).astype(jnp.float32)
    for ky in range(3):  # static unroll: 3 MXU pushes with M = Bt*H rows each
        lhs = xin_ref[:, ky:ky + H, :].reshape(M, C1W)
        acc1 = acc1 + jnp.dot(lhs, w1_ref[ky], preferred_element_type=jnp.float32)

    # ---- hand stage-1 result to stage 2 through VMEM (body rows only) ----
    mid_ref[:, 1:H + 1, :] = acc1.reshape(bt, H, C2W).astype(mid_ref.dtype)

    # ---- stage 2: final 3x3 conv -> lane-dense (Bt, H, W*C3) output slab ----
    acc2 = jnp.broadcast_to(b2_ref[...], (M, C3W)).astype(jnp.float32)
    for ky in range(3):
        lhs = mid_ref[:, ky:ky + H, :].reshape(M, C2W)
        acc2 = acc2 + jnp.dot(lhs, w2_ref[ky], preferred_element_type=jnp.float32)

    o_ref[...] = acc2.reshape(bt, H, C3W).astype(o_ref.dtype)


def _resident_spec(block_shape, index_map):
    """BlockSpec for grid-invariant operands (weights/biases): single-buffered.

    Their index_map is constant, so double-buffering only wastes VMEM; this
    matters most on v7x (64 MiB) as the banded weights grow O(W^2*Cin*Cout).
    Falls back to a default-buffered spec on older jax without pipeline_mode.
    """
    try:
        return pl.BlockSpec(block_shape, index_map, pipeline_mode=pl.Buffered(1))
    except Exception:  # pl.Buffered / pipeline_mode unavailable
        return pl.BlockSpec(block_shape, index_map)


def _fused_srlsgat_call(xin_slab, w1_band, b1_slab, w2_band, b2_slab, bt):
    Bpad, Hp2, C1W = xin_slab.shape
    H = Hp2 - 2
    C2W = w1_band.shape[-1]
    C3W = w2_band.shape[-1]
    n_steps = Bpad // bt

    flops = int(Bpad * 2 * 3 * H * (C1W * C2W + C2W * C3W))
    bytes_accessed = int(sum(a.size * a.dtype.itemsize
                             for a in (xin_slab, w1_band, b1_slab, w2_band, b2_slab))
                         + Bpad * H * C3W * 4)

    return pl.pallas_call(
        _fused_srlsgat_kernel,
        out_shape=jax.ShapeDtypeStruct((Bpad, H, C3W), jnp.float32),
        grid=(n_steps,),
        in_specs=[
            pl.BlockSpec((bt, Hp2, C1W), lambda b: (b, 0, 0)),
            _resident_spec((3, C1W, C2W), lambda b: (0, 0, 0)),
            _resident_spec((1, C2W), lambda b: (0, 0)),
            _resident_spec((3, C2W, C3W), lambda b: (0, 0, 0)),
            _resident_spec((1, C3W), lambda b: (0, 0)),
        ],
        out_specs=pl.BlockSpec((bt, H, C3W), lambda b: (b, 0, 0)),
        # bf16 stage-1 handoff is an explicit choice (half the scratch bytes).
        scratch_shapes=[pltpu.VMEM((bt, Hp2, C2W), xin_slab.dtype)],
        compiler_params=pltpu.CompilerParams(dimension_semantics=("parallel",)),
        cost_estimate=pl.CostEstimate(flops=flops, transcendentals=0,
                                      bytes_accessed=bytes_accessed),
    )(xin_slab, w1_band, b1_slab, w2_band, b2_slab)


def _choose_batch_tile(B, H):
    """Pick Bt so M = Bt*H targets >= 128 MXU rows per grid step."""
    # TODO(synk): on v7x keep >= 2 grid steps (split B or add an H-tile axis)
    # once B*H is large enough so both TensorCores get work; at B=2, H=16 the
    # whole problem is one small step anyway.
    target_rows = 128
    return max(1, min(B, -(-target_rows // H)))


# ---------------------------------------------------------------------------
# Weight plumbing: fold the kx taps and the zero W-padding into banded matrices
# ---------------------------------------------------------------------------
def _banded_weight(w_oihw, W):
    """(Cout, Cin, 3, 3) -> (3, W*Cin, W*Cout) block-banded matrices, one per ky.

    B_ky[w'*Cin + ci, w*Cout + co] = w_oihw[co, ci, ky, kx]  where w' = w + kx - 1
    (rows outside [0, W) simply do not exist -> implicit zero padding along W).
    """
    taps = jnp.transpose(w_oihw, (2, 3, 1, 0))        # (ky, kx, Cin, Cout)
    _, _, cin, cout = taps.shape
    src = jnp.arange(W)[:, None]                       # w' (source column)
    dst = jnp.arange(W)[None, :]                       # w  (output column)
    bands = []
    for ky in range(3):
        b = jnp.zeros((W, cin, W, cout), dtype=taps.dtype)
        for kx in range(3):
            sel = (src == dst + kx - 1).astype(taps.dtype)          # (W, W)
            b = b + sel[:, None, :, None] * taps[ky, kx][None, :, None, :]
        bands.append(b.reshape(W * cin, W * cout))
    return jnp.stack(bands, axis=0)


# ---------------------------------------------------------------------------
# Parameters (deterministic init, PyTorch Conv2d-style shapes / bounds)
# ---------------------------------------------------------------------------
def default_conv_params(key, cin, cout, kernel_size=3):
    fan_in = cin * kernel_size * kernel_size
    bound = 1.0 / math.sqrt(fan_in)
    kw, kb = jax.random.split(key)
    w = jax.random.uniform(kw, (cout, cin, kernel_size, kernel_size),
                           minval=-bound, maxval=bound, dtype=jnp.float32)
    b = jax.random.uniform(kb, (cout,), minval=-bound, maxval=bound,
                           dtype=jnp.float32)
    return w, b


# ---------------------------------------------------------------------------
# SRLSGAT model
# ---------------------------------------------------------------------------
class SRLSGATPallas:
    def __init__(self, key, n_subs=4, n_ovls=1, in_feats=8, out_feats=16,
                 n_blocks=6, n_scale=8, use_share=True, image_width=16,
                 compute_dtype=jnp.bfloat16):
        del n_blocks, n_scale  # only used inside global_net (see TODO below)
        self.shared = use_share
        # bf16 operands with f32 MXU accumulation (biases kept f32); set
        # compute_dtype=jnp.float32 to recover the tight-tolerance path.
        self.compute_dtype = compute_dtype
        self.G = math.ceil((in_feats - n_ovls) / (n_subs - n_ovls))
        self.start_idx, self.end_idx = [], []
        for g in range(self.G):
            sta = (n_subs - n_ovls) * g
            end = sta + n_subs
            if end > in_feats:
                end = in_feats
                sta = in_feats - n_subs
            self.start_idx.append(sta)
            self.end_idx.append(end)

        kb, ks, kf = jax.random.split(key, 3)
        # TODO(synk): `global_net` is not defined in the provided source; the
        # shared branch (and the non-shared per-group branches) are stood in by
        # a single 3x3 conv (n_subs -> out_feats) and the n_scale spatial
        # upsampling is not reproduced.
        self.branch_w, self.branch_b = default_conv_params(kb, n_subs, out_feats)
        self.skip_w, self.skip_b = default_conv_params(ks, in_feats, out_feats)
        self.final_w, self.final_b = default_conv_params(kf, out_feats, in_feats)

        # Banded weights / bias slabs depend only on the weights and W: build
        # them once here (cached per width), never inside the per-call trace.
        self._band_cache = {}
        self._get_bands(image_width)

        self._fwd = jax.jit(self._forward)

    def _get_bands(self, W):
        if W not in self._band_cache:
            cd = self.compute_dtype
            # conv(xg, Wb) + conv(lms, Ws) == conv(concat([xg, lms]), concat([Wb, Ws]))
            w1 = jnp.concatenate([self.branch_w, self.skip_w], axis=1)
            b1 = self.branch_b + self.skip_b
            w1_band = _banded_weight(w1, W).astype(cd)
            w2_band = _banded_weight(self.final_w, W).astype(cd)
            b1_slab = jnp.tile(b1.reshape(1, -1), (1, W)).astype(jnp.float32)
            b2_slab = jnp.tile(self.final_b.reshape(1, -1), (1, W)).astype(jnp.float32)
            self._band_cache[W] = tuple(
                jax.device_put(a) for a in (w1_band, b1_slab, w2_band, b2_slab))
        return self._band_cache[W]

    def _forward(self, x_nchw, lms_nchw, w1_band, b1_slab, w2_band, b2_slab):
        B, _, H, W = x_nchw.shape
        C3 = self.final_b.shape[0]

        x = jnp.transpose(x_nchw, (0, 2, 3, 1))        # NCHW -> NHWC
        lms = jnp.transpose(lms_nchw, (0, 2, 3, 1))

        # In the PyTorch forward, xi is overwritten every loop iteration and
        # only the last group survives -> compute only g = G-1 (identical).
        sta, end = self.start_idx[-1], self.end_idx[-1]
        xin = jnp.concatenate([x[..., sta:end], lms], axis=-1)     # (B, H, W, C1)
        C1 = xin.shape[-1]

        # Fold Bt images into the matmul M dimension; pad B up to a multiple.
        bt = _choose_batch_tile(B, H)
        Bpad = -(-B // bt) * bt

        # Batch pad (zeros), H-only zero pad, merge (W, C) onto the lane axis.
        xin_pad = jnp.pad(xin, ((0, Bpad - B), (1, 1), (0, 0), (0, 0)))
        xin_slab = xin_pad.reshape(Bpad, H + 2, W * C1).astype(self.compute_dtype)

        out_slab = _fused_srlsgat_call(xin_slab, w1_band, b1_slab,
                                       w2_band, b2_slab, bt)
        y = out_slab[:B].reshape(B, H, W, C3)
        return jnp.transpose(y, (0, 3, 1, 2))           # NHWC -> NCHW

    def __call__(self, x_nchw, lms_nchw):
        bands = self._get_bands(x_nchw.shape[-1])
        return self._fwd(x_nchw, lms_nchw, *bands)


# ---------------------------------------------------------------------------
# Pure-JAX reference for verification (mirrors the PyTorch forward structure)
# ---------------------------------------------------------------------------
def _ref_conv(x_nchw, w_oihw, b):
    out = jax.lax.conv_general_dilated(
        x_nchw, w_oihw, window_strides=(1, 1), padding=((1, 1), (1, 1)),
        dimension_numbers=("NCHW", "OIHW", "NCHW"))
    return out + b[None, :, None, None]


def reference_forward(model, x, lms):
    xi = None
    for g in range(model.G):
        xg = x[:, model.start_idx[g]:model.end_idx[g], :, :]
        xi = _ref_conv(xg, model.branch_w, model.branch_b)
    y = xi + _ref_conv(lms, model.skip_w, model.skip_b)
    return _ref_conv(y, model.final_w, model.final_b)


# ---------------------------------------------------------------------------
if __name__ == "__main__":
    key = jax.random.PRNGKey(0)
    kx, kl, kp = jax.random.split(key, 3)

    B, in_feats, H, W = 2, 8, 16, 16
    n_subs, n_ovls, out_feats = 4, 1, 16

    x = jax.random.normal(kx, (B, in_feats, H, W), dtype=jnp.float32)
    lms = jax.random.normal(kl, (B, in_feats, H, W), dtype=jnp.float32)

    model = SRLSGATPallas(kp, n_subs=n_subs, n_ovls=n_ovls,
                          in_feats=in_feats, out_feats=out_feats,
                          image_width=W)

    y = jax.block_until_ready(model(x, lms))

    y_ref = reference_forward(model, x, lms)
    assert y.shape == (B, in_feats, H, W), y.shape
    max_err = float(jnp.max(jnp.abs(y - y_ref)))
    ref_scale = float(jnp.max(jnp.abs(y_ref)))
    # bf16 operands with f32 accumulation: ~1e-2 relative error budget.
    assert max_err < 5e-2 * max(1.0, ref_scale), (max_err, ref_scale)

    print("KERNEL_OK")
</pallas_src>

<mosaic_0001>
module attributes {stable_mosaic.version = 11 : i64} {
  func.func @_fused_srlsgat_kernel(%arg0: i32, %arg1: memref<2x18x192xbf16, #tpu.memory_space<vmem>>, %arg2: memref<3x192x256xbf16, #tpu.memory_space<vmem>>, %arg3: memref<1x256xf32, #tpu.memory_space<vmem>>, %arg4: memref<3x256x128xbf16, #tpu.memory_space<vmem>>, %arg5: memref<1x128xf32, #tpu.memory_space<vmem>>, %arg6: memref<2x16x128xf32, #tpu.memory_space<vmem>>, %arg7: memref<2x18x256xbf16, #tpu.memory_space<vmem>>) attributes {dimension_semantics = [#tpu.dimension_semantics<parallel>], iteration_bounds = array<i64: 1>, scalar_prefetch = 0 : i64, scratch_operands = 1 : i64, tpu.core_type = #tpu.core_type<tc>, window_params = [{transform_indices = @transform_0, window_bounds = array<i64: 2, 18, 192>}, {pipeline_mode = #tpu.pipeline_mode<synchronous>, transform_indices = @transform_1, window_bounds = array<i64: 3, 192, 256>}, {pipeline_mode = #tpu.pipeline_mode<synchronous>, transform_indices = @transform_2, window_bounds = array<i64: 1, 256>}, {pipeline_mode = #tpu.pipeline_mode<synchronous>, transform_indices = @transform_3, window_bounds = array<i64: 3, 256, 128>}, {pipeline_mode = #tpu.pipeline_mode<synchronous>, transform_indices = @transform_4, window_bounds = array<i64: 1, 128>}, {transform_indices = @transform_5, window_bounds = array<i64: 2, 16, 128>}]} {
    %c0_i32 = arith.constant 0 : i32
    %0 = arith.cmpi eq, %arg0, %c0_i32 : i32
    %1 = arith.extui %0 : i1 to i32
    %c0_i32_0 = arith.constant 0 : i32
    %2 = arith.cmpi ne, %1, %c0_i32_0 : i32
    scf.if %2 {
      %cst_49 = arith.constant 0.000000e+00 : bf16
      %50 = vector.broadcast %cst_49 : bf16 to vector<2x1x256xbf16>
      %c0_50 = arith.constant 0 : index
      %c0_51 = arith.constant 0 : index
      %c0_52 = arith.constant 0 : index
      %51 = vector.load %arg7[%c0_50, %c0_51, %c0_52] : memref<2x18x256xbf16, #tpu.memory_space<vmem>>, vector<2x1x256xbf16>
      tpu.vector_store %arg7[%c0_50, %c0_51, %c0_52], %50 {strides = array<i32>} : memref<2x18x256xbf16, #tpu.memory_space<vmem>>, vector<2x1x256xbf16>,
      %c0_53 = arith.constant 0 : index
      %c17 = arith.constant 17 : index
      %c0_54 = arith.constant 0 : index
      %52 = vector.load %arg7[%c0_53, %c17, %c0_54] : memref<2x18x256xbf16, #tpu.memory_space<vmem>>, vector<2x1x256xbf16>
      tpu.vector_store %arg7[%c0_53, %c17, %c0_54], %50 {strides = array<i32>} : memref<2x18x256xbf16, #tpu.memory_space<vmem>>, vector<2x1x256xbf16>,
    } else {
    }
    %c0 = arith.constant 0 : index
    %c0_1 = arith.constant 0 : index
    %3 = vector.load %arg3[%c0, %c0_1] : memref<1x256xf32, #tpu.memory_space<vmem>>, vector<1x256xf32>
    %4 = vector.shape_cast %3 : vector<1x256xf32> to vector<1x256xf32>
    %5 = vector.broadcast %4 : vector<1x256xf32> to vector<32x256xf32>
    %c0_2 = arith.constant 0 : index
    %c0_3 = arith.constant 0 : index
    %c0_4 = arith.constant 0 : index
    %6 = vector.load %arg1[%c0_2, %c0_3, %c0_4] : memref<2x18x192xbf16, #tpu.memory_space<vmem>>, vector<2x16x192xbf16>
    %7 = vector.shape_cast %6 : vector<2x16x192xbf16> to vector<32x192xbf16>
    %c0_5 = arith.constant 0 : index
    %c0_6 = arith.constant 0 : index
    %c0_7 = arith.constant 0 : index
    %8 = vector.load %arg2[%c0_5, %c0_6, %c0_7] : memref<3x192x256xbf16, #tpu.memory_space<vmem>>, vector<1x192x256xbf16>
    %9 = vector.shape_cast %8 : vector<1x192x256xbf16> to vector<192x256xbf16>
    %cst = arith.constant dense<0.000000e+00> : vector<32x256xf32>
    %10 = tpu.matmul %7, %9, %cst {dimension_numbers = #tpu.dot_dimension_numbers<[1], [0], [0], [1], [0, 0, 1, 1], [], []>} : vector<32x192xbf16>, vector<192x256xbf16>, vector<32x256xf32> -> vector<32x256xf32>
    %11 = arith.addf %5, %10 : vector<32x256xf32>
    %c0_8 = arith.constant 0 : index
    %c1 = arith.constant 1 : index
    %c0_9 = arith.constant 0 : index
    %12 = vector.load %arg1[%c0_8, %c1, %c0_9] : memref<2x18x192xbf16, #tpu.memory_space<vmem>>, vector<2x16x192xbf16>
    %13 = vector.shape_cast %12 : vector<2x16x192xbf16> to vector<32x192xbf16>
    %c1_10 = arith.constant 1 : index
    %c0_11 = arith.constant 0 : index
    %c0_12 = arith.constant 0 : index
    %14 = vector.load %arg2[%c1_10, %c0_11, %c0_12] : memref<3x192x256xbf16, #tpu.memory_space<vmem>>, vector<1x192x256xbf16>
    %15 = vector.shape_cast %14 : vector<1x192x256xbf16> to vector<192x256xbf16>
    %cst_13 = arith.constant dense<0.000000e+00> : vector<32x256xf32>
    %16 = tpu.matmul %13, %15, %cst_13 {dimension_numbers = #tpu.dot_dimension_numbers<[1], [0], [0], [1], [0, 0, 1, 1], [], []>} : vector<32x192xbf16>, vector<192x256xbf16>, vector<32x256xf32> -> vector<32x256xf32>
    %17 = arith.addf %11, %16 : vector<32x256xf32>
    %c0_14 = arith.constant 0 : index
    %c2 = arith.constant 2 : index
    %c0_15 = arith.constant 0 : index
    %18 = vector.load %arg1[%c0_14, %c2, %c0_15] : memref<2x18x192xbf16, #tpu.memory_space<vmem>>, vector<2x16x192xbf16>
    %19 = vector.shape_cast %18 : vector<2x16x192xbf16> to vector<32x192xbf16>
    %c2_16 = arith.constant 2 : index
    %c0_17 = arith.constant 0 : index
    %c0_18 = arith.constant 0 : index
    %20 = vector.load %arg2[%c2_16, %c0_17, %c0_18] : memref<3x192x256xbf16, #tpu.memory_space<vmem>>, vector<1x192x256xbf16>
    %21 = vector.shape_cast %20 : vector<1x192x256xbf16> to vector<192x256xbf16>
    %cst_19 = arith.constant dense<0.000000e+00> : vector<32x256xf32>
    %22 = tpu.matmul %19, %21, %cst_19 {dimension_numbers = #tpu.dot_dimension_numbers<[1], [0], [0], [1], [0, 0, 1, 1], [], []>} : vector<32x192xbf16>, vector<192x256xbf16>, vector<32x256xf32> -> vector<32x256xf32>
    %23 = arith.addf %17, %22 : vector<32x256xf32>
    %24 = vector.shape_cast %23 : vector<32x256xf32> to vector<2x16x256xf32>
    %25 = arith.truncf %24 : vector<2x16x256xf32> to vector<2x16x256xbf16>
    %c0_20 = arith.constant 0 : index
    %c1_21 = arith.constant 1 : index
    %c0_22 = arith.constant 0 : index
    %26 = vector.load %arg7[%c0_20, %c1_21, %c0_22] : memref<2x18x256xbf16, #tpu.memory_space<vmem>>, vector<2x16x256xbf16>
    tpu.vector_store %arg7[%c0_20, %c1_21, %c0_22], %25 {strides = array<i32>} : memref<2x18x256xbf16, #tpu.memory_space<vmem>>, vector<2x16x256xbf16>,
    %c0_23 = arith.constant 0 : index
    %c0_24 = arith.constant 0 : index
    %27 = vector.load %arg5[%c0_23, %c0_24] : memref<1x128xf32, #tpu.memory_space<vmem>>, vector<1x128xf32>
    %28 = vector.shape_cast %27 : vector<1x128xf32> to vector<1x128xf32>
    %29 = vector.broadcast %28 : vector<1x128xf32> to vector<32x128xf32>
    %c0_25 = arith.constant 0 : index
    %c0_26 = arith.constant 0 : index
    %c0_27 = arith.constant 0 : index
    %30 = vector.load %arg7[%c0_25, %c0_26, %c0_27] : memref<2x18x256xbf16, #tpu.memory_space<vmem>>, vector<2x16x256xbf16>
    %31 = vector.shape_cast %30 : vector<2x16x256xbf16> to vector<32x256xbf16>
    %c0_28 = arith.constant 0 : index
    %c0_29 = arith.constant 0 : index
    %c0_30 = arith.constant 0 : index
    %32 = vector.load %arg4[%c0_28, %c0_29, %c0_30] : memref<3x256x128xbf16, #tpu.memory_space<vmem>>, vector<1x256x128xbf16>
    %33 = vector.shape_cast %32 : vector<1x256x128xbf16> to vector<256x128xbf16>
    %cst_31 = arith.constant dense<0.000000e+00> : vector<32x128xf32>
    %34 = tpu.matmul %31, %33, %cst_31 {dimension_numbers = #tpu.dot_dimension_numbers<[1], [0], [0], [1], [0, 0, 1, 1], [], []>} : vector<32x256xbf16>, vector<256x128xbf16>, vector<32x128xf32> -> vector<32x128xf32>
    %35 = arith.addf %29, %34 : vector<32x128xf32>
    %c0_32 = arith.constant 0 : index
    %c1_33 = arith.constant 1 : index
    %c0_34 = arith.constant 0 : index
    %36 = vector.load %arg7[%c0_32, %c1_33, %c0_34] : memref<2x18x256xbf16, #tpu.memory_space<vmem>>, vector<2x16x256xbf16>
    %37 = vector.shape_cast %36 : vector<2x16x256xbf16> to vector<32x256xbf16>
    %c1_35 = arith.constant 1 : index
    %c0_36 = arith.constant 0 : index
    %c0_37 = arith.constant 0 : index
    %38 = vector.load %arg4[%c1_35, %c0_36, %c0_37] : memref<3x256x128xbf16, #tpu.memory_space<vmem>>, vector<1x256x128xbf16>
    %39 = vector.shape_cast %38 : vector<1x256x128xbf16> to vector<256x128xbf16>
    %cst_38 = arith.constant dense<0.000000e+00> : vector<32x128xf32>
    %40 = tpu.matmul %37, %39, %cst_38 {dimension_numbers = #tpu.dot_dimension_numbers<[1], [0], [0], [1], [0, 0, 1, 1], [], []>} : vector<32x256xbf16>, vector<256x128xbf16>, vector<32x128xf32> -> vector<32x128xf32>
    %41 = arith.addf %35, %40 : vector<32x128xf32>
    %c0_39 = arith.constant 0 : index
    %c2_40 = arith.constant 2 : index
    %c0_41 = arith.constant 0 : index
    %42 = vector.load %arg7[%c0_39, %c2_40, %c0_41] : memref<2x18x256xbf16, #tpu.memory_space<vmem>>, vector<2x16x256xbf16>
    %43 = vector.shape_cast %42 : vector<2x16x256xbf16> to vector<32x256xbf16>
    %c2_42 = arith.constant 2 : index
    %c0_43 = arith.constant 0 : index
    %c0_44 = arith.constant 0 : index
    %44 = vector.load %arg4[%c2_42, %c0_43, %c0_44] : memref<3x256x128xbf16, #tpu.memory_space<vmem>>, vector<1x256x128xbf16>
    %45 = vector.shape_cast %44 : vector<1x256x128xbf16> to vector<256x128xbf16>
    %cst_45 = arith.constant dense<0.000000e+00> : vector<32x128xf32>
    %46 = tpu.matmul %43, %45, %cst_45 {dimension_numbers = #tpu.dot_dimension_numbers<[1], [0], [0], [1], [0, 0, 1, 1], [], []>} : vector<32x256xbf16>, vector<256x128xbf16>, vector<32x128xf32> -> vector<32x128xf32>
    %47 = arith.addf %41, %46 : vector<32x128xf32>
    %48 = vector.shape_cast %47 : vector<32x128xf32> to vector<2x16x128xf32>
    %c0_46 = arith.constant 0 : index
    %c0_47 = arith.constant 0 : index
    %c0_48 = arith.constant 0 : index
    %49 = vector.load %arg6[%c0_46, %c0_47, %c0_48] : memref<2x16x128xf32, #tpu.memory_space<vmem>>, vector<2x16x128xf32>
    tpu.vector_store %arg6[%c0_46, %c0_47, %c0_48], %48 {strides = array<i32>} : memref<2x16x128xf32, #tpu.memory_space<vmem>>, vector<2x16x128xf32>,
    return
  }
  func.func @transform_0(%arg0: i32) -> (i32, i32, i32) {
    %c0_i32 = arith.constant 0 : i32
    %c0_i32_0 = arith.constant 0 : i32
    %c0_i32_1 = arith.constant 0 : i32
    return %arg0, %c0_i32, %c0_i32_0 : i32, i32, i32
  }
  func.func @transform_1(%arg0: i32) -> (i32, i32, i32) {
    %c0_i32 = arith.constant 0 : i32
    %c0_i32_0 = arith.constant 0 : i32
    %c0_i32_1 = arith.constant 0 : i32
    %c0_i32_2 = arith.constant 0 : i32
    return %c0_i32, %c0_i32_0, %c0_i32_1 : i32, i32, i32
  }
  func.func @transform_2(%arg0: i32) -> (i32, i32) {
    %c0_i32 = arith.constant 0 : i32
    %c0_i32_0 = arith.constant 0 : i32
    %c0_i32_1 = arith.constant 0 : i32
    return %c0_i32, %c0_i32_0 : i32, i32
  }
  func.func @transform_3(%arg0: i32) -> (i32, i32, i32) {
    %c0_i32 = arith.constant 0 : i32
    %c0_i32_0 = arith.constant 0 : i32
    %c0_i32_1 = arith.constant 0 : i32
    %c0_i32_2 = arith.constant 0 : i32
    return %c0_i32, %c0_i32_0, %c0_i32_1 : i32, i32, i32
  }
  func.func @transform_4(%arg0: i32) -> (i32, i32) {
    %c0_i32 = arith.constant 0 : i32
    %c0_i32_0 = arith.constant 0 : i32
    %c0_i32_1 = arith.constant 0 : i32
    return %c0_i32, %c0_i32_0 : i32, i32
  }
  func.func @transform_5(%arg0: i32) -> (i32, i32, i32) {
    %c0_i32 = arith.constant 0 : i32
    %c0_i32_0 = arith.constant 0 : i32
    %c0_i32_1 = arith.constant 0 : i32
    return %arg0, %c0_i32, %c0_i32_0 : i32, i32, i32
  }
}

</mosaic_0001>

<llo_original>
// kernel: _forward.1
$region0: #{_forward.1}
  #allocation0 [shape = 'u32[]', space=smem, size = 0x4, offset = 0x4, fixed_abs, tag = 'smem constant byte address 0x4 - core index']
  #allocation1 [shape = 'u32[144,128]{1,0:T(1,128)}', space=vmem, size = 0x12000, scoped, tag = 'internal scratch']
  #allocation2 [shape = 'bf16[2,18,256]{2,1,0:T(8,128)(2,1)}', space=vmem, size = 0x6000, scoped, tag = 'scratch operand']
  %s0 = inlined_call_operand.vmem [shape: bf16[2,18,192], index: 0, kind: input, shape index: {}]
  %s1 = inlined_call_operand.vmem [shape: bf16[3,192,256], index: 1, kind: input, shape index: {}]
  %s2 = inlined_call_operand.vmem [shape: f32[1,256], index: 2, kind: input, shape index: {}]
  %s3 = inlined_call_operand.vmem [shape: bf16[3,256,128], index: 3, kind: input, shape index: {}]
  %s4 = inlined_call_operand.vmem [shape: f32[1,128], index: 4, kind: input, shape index: {}]
  %s5 = inlined_call_operand.vmem [shape: f32[2,16,128], index: 5, kind: output, shape index: {}]
  %s6 = sld [smem:[#allocation0]]
  $region34: #{_forward.1} parent=0
    _
  %s8 = ssub.s32 1, %s6
  %s9 = scalar_select 0, %s8, %s6
  // Predicated region
  $region2: #{_forward.1} parent=0 // pred_check
    _
  $region3: #{_forward.1} parent=0 // pred_check_branch
    %11 = sbr.rel (0) target = $region5
  $region4: #{_forward.1} parent=0 // pred_region
    _
  $region5: #{_forward.1} parent=0 // pred_fallthru
    _
  // Predicated region
  $region6: #{_forward.1} parent=0 // pred_check
    _
  $region7: #{_forward.1} parent=0 // pred_check_branch
    %13 = sbr.rel (0) target = $region9
  $region8: #{_forward.1} parent=0 // pred_region
    _
  $region9: #{_forward.1} parent=0 // pred_fallthru
    _
  // Predicated region
  $region10: #{_forward.1} parent=0 // pred_check
    _
  $region11: #{_forward.1} parent=0 // pred_check_branch
    %15 = sbr.rel (0) target = $region13
  $region12: #{_forward.1} parent=0 // pred_region
    _
  $region13: #{_forward.1} parent=0 // pred_fallthru
    _
  // Predicated region
  $region14: #{_forward.1} parent=0 // pred_check
    _
  $region15: #{_forward.1} parent=0 // pred_check_branch
    %17 = sbr.rel (0) target = $region17
  $region16: #{_forward.1} parent=0 // pred_region
    _
  $region17: #{_forward.1} parent=0 // pred_fallthru
    _
  // Predicated region
  $region18: #{_forward.1} parent=0 // pred_check
    _
  $region19: #{_forward.1} parent=0 // pred_check_branch
    %19 = sbr.rel (0) target = $region21
  $region20: #{_forward.1} parent=0 // pred_region
    _
  $region21: #{_forward.1} parent=0 // pred_fallthru
    _
  %p21 = scmp.eq.s32.totalorder 0, 0
  // Predicated region
  $region22: #{_forward.1} parent=0 // pred_check
    %p22 = pneg %p21
  $region23: #{_forward.1} parent=0 // pred_check_branch
    %24 = sbr.rel (%p22) target = $region25
  $region24: #{_forward.1} parent=0 // pred_region
    %vm25 = vcmask 1040384
    %vm26 = vsmask.f32 256
    %vm27 = vmand %vm25, %vm26
    %vm28 = vcmask 1044484
    %vm29 = vsmask.f32 4352
    %vm30 = vmand %vm28, %vm29
    %vm31 = vmor %vm30, %vm27
    %v32 = vld [vmem:[#allocation2] sm:$0x11]
    %v33 = vsel %vm31, 0, %v32
    %34 = vst [vmem:[#allocation2] sm:$0x11] %v33
    %v35 = vld [vmem:[#allocation2 + $0x18] sm:$0x11]
    %v36 = vsel %vm31, 0, %v35
    %37 = vst [vmem:[#allocation2 + $0x18] sm:$0x11] %v36
    %vm38 = vsmask.f32 7938
    %vm39 = vmand %vm25, %vm38
    %vm40 = vsmask.f32 7954
    %vm41 = vmand %vm28, %vm40
    %vm42 = vmor %vm41, %vm39
    %v43 = vld [vmem:[#allocation2 + $0x10] sm:$0x11]
    %v44 = vsel %vm42, 0, %v43
    %45 = vst [vmem:[#allocation2 + $0x10] sm:$0x11] %v44
    %v46 = vld [vmem:[#allocation2 + $0x28] sm:$0x11]
    %v47 = vsel %vm42, 0, %v46
    %48 = vst [vmem:[#allocation2 + $0x28] sm:$0x11] %v47
  $region25: #{_forward.1} parent=0 // pred_fallthru
    _
  %v49 = vld [vmem:[%s2] sm:$0x3]
  %v51 = vlaneseq
  %v52 = vshrl.u32 %v51, 7
  %v53 = vsub.s32 0, %v52
  %v54 = vrot.slane %v49, %v53
  %v55 = vlaneseq
  %v56 = vshrl.u32 %v55, 7
  %v57 = vsub.s32 1, %v56
  %v58 = vrot.slane %v49, %v57
  %v61 = vld [vmem:[%s0] sm:$0xff]
  %v62 = vld [vmem:[%s0 + $0x8] sm:$0xff]
  %v63 = vld [vmem:[%s0 + $0x18] sm:$0xff]
  %v64 = vld [vmem:[%s0 + $0x20] sm:$0xff]
  %v65 = vld [vmem:[%s1] sm:$0xff]
  %v66 = vld [vmem:[%s1 + $0x8] sm:$0xff]
  %v67 = vld [vmem:[%s1 + $0x10] sm:$0xff]
  %v68 = vld [vmem:[%s1 + $0x18] sm:$0xff]
  %v69 = vld [vmem:[%s1 + $0x20] sm:$0xff]
  %v70 = vld [vmem:[%s1 + $0x28] sm:$0xff]
  %v71 = vld [vmem:[%s1 + $0x30] sm:$0xff]
  %v72 = vld [vmem:[%s1 + $0x38] sm:$0xff]
  %v73 = vld [vmem:[%s1 + $0x40] sm:$0xff]
  %v74 = vld [vmem:[%s1 + $0x48] sm:$0xff]
  %v75 = vld [vmem:[%s1 + $0x50] sm:$0xff]
  %v76 = vld [vmem:[%s1 + $0x58] sm:$0xff]
  %v77 = vld [vmem:[%s1 + $0x60] sm:$0xff]
  %v78 = vld [vmem:[%s1 + $0x68] sm:$0xff]
  %v79 = vld [vmem:[%s1 + $0x70] sm:$0xff]
  %v80 = vld [vmem:[%s1 + $0x78] sm:$0xff]
  %v81 = vld [vmem:[%s1 + $0x80] sm:$0xff]
  %v82 = vld [vmem:[%s1 + $0x88] sm:$0xff]
  %v83 = vld [vmem:[%s1 + $0x90] sm:$0xff]
  %v84 = vld [vmem:[%s1 + $0x98] sm:$0xff]
  %v85 = vld [vmem:[%s1 + $0xa0] sm:$0xff]
  %v86 = vld [vmem:[%s1 + $0xa8] sm:$0xff]
  %v87 = vld [vmem:[%s1 + $0xb0] sm:$0xff]
  %v88 = vld [vmem:[%s1 + $0xb8] sm:$0xff]
  %v93 = vunpack.c.l.b16 %v61
  %v94 = vunpack.c.h.b16 %v61
  %v95 = vunpack.c.l.b16 %v62
  %v96 = vunpack.c.h.b16 %v62
  %v97 = vunpack.c.l.b16 %v63
  %v98 = vunpack.c.h.b16 %v63
  %v99 = vunpack.c.l.b16 %v64
  %v100 = vunpack.c.h.b16 %v64
  %v101 = vpack.c.b16 %v95, %v93
  %v102 = vpack.c.b16 %v96, %v94
  %v103 = vpack.c.b16 %v99, %v97
  %v104 = vpack.c.b16 %v100, %v98
  %v131 = vunpack.c.l.b16 %v65
  %v132 = vunpack.c.h.b16 %v65
  %v133 = vunpack.c.l.b16 %v66
  %v134 = vunpack.c.h.b16 %v66
  %v135 = vunpack.c.l.b16 %v67
  %v136 = vunpack.c.h.b16 %v67
  %v137 = vunpack.c.l.b16 %v68
  %v138 = vunpack.c.h.b16 %v68
  %v139 = vunpack.c.l.b16 %v69
  %v140 = vunpack.c.h.b16 %v69
  %v141 = vunpack.c.l.b16 %v70
  %v142 = vunpack.c.h.b16 %v70
  %v143 = vunpack.c.l.b16 %v71
  %v144 = vunpack.c.h.b16 %v71
  %v145 = vunpack.c.l.b16 %v72
  %v146 = vunpack.c.h.b16 %v72
  %v147 = vunpack.c.l.b16 %v73
  %v148 = vunpack.c.h.b16 %v73
  %v149 = vunpack.c.l.b16 %v74
  %v150 = vunpack.c.h.b16 %v74
  %v151 = vunpack.c.l.b16 %v75
  %v152 = vunpack.c.h.b16 %v75
  %v153 = vunpack.c.l.b16 %v76
  %v154 = vunpack.c.h.b16 %v76
  %v155 = vunpack.c.l.b16 %v77
  %v156 = vunpack.c.h.b16 %v77
  %v157 = vunpack.c.l.b16 %v78
  %v158 = vunpack.c.h.b16 %v78
  %v159 = vunpack.c.l.b16 %v79
  %v160 = vunpack.c.h.b16 %v79
  %v161 = vunpack.c.l.b16 %v80
  %v162 = vunpack.c.h.b16 %v80
  %v163 = vunpack.c.l.b16 %v81
  %v164 = vunpack.c.h.b16 %v81
  %v165 = vunpack.c.l.b16 %v82
  %v166 = vunpack.c.h.b16 %v82
  %v167 = vunpack.c.l.b16 %v83
  %v168 = vunpack.c.h.b16 %v83
  %v169 = vunpack.c.l.b16 %v84
  %v170 = vunpack.c.h.b16 %v84
  %v171 = vunpack.c.l.b16 %v85
  %v172 = vunpack.c.h.b16 %v85
  %v173 = vunpack.c.l.b16 %v86
  %v174 = vunpack.c.h.b16 %v86
  %v175 = vunpack.c.l.b16 %v87
  %v176 = vunpack.c.h.b16 %v87
  %v177 = vunpack.c.l.b16 %v88
  %v178 = vunpack.c.h.b16 %v88
  %v179 = vpack.c.b16 %v133, %v131
  %v180 = vpack.c.b16 %v134, %v132
  %v181 = vpack.c.b16 %v137, %v135
  %v182 = vpack.c.b16 %v138, %v136
  %v183 = vpack.c.b16 %v141, %v139
  %v184 = vpack.c.b16 %v142, %v140
  %v185 = vpack.c.b16 %v145, %v143
  %v186 = vpack.c.b16 %v146, %v144
  %v187 = vpack.c.b16 %v149, %v147
  %v188 = vpack.c.b16 %v150, %v148
  %v189 = vpack.c.b16 %v153, %v151
  %v190 = vpack.c.b16 %v154, %v152
  %v191 = vpack.c.b16 %v157, %v155
  %v192 = vpack.c.b16 %v158, %v156
  %v193 = vpack.c.b16 %v161, %v159
  %v194 = vpack.c.b16 %v162, %v160
  %v195 = vpack.c.b16 %v165, %v163
  %v196 = vpack.c.b16 %v166, %v164
  %v197 = vpack.c.b16 %v169, %v167
  %v198 = vpack.c.b16 %v170, %v168
  %v199 = vpack.c.b16 %v173, %v171
  %v200 = vpack.c.b16 %v174, %v172
  %v201 = vpack.c.b16 %v177, %v175
  %v202 = vpack.c.b16 %v178, %v176
  %vm227 = vcmask 523264
  %v229 = vsel %vm227, %v102, 0
  %v232 = vsel %vm227, %v104, 0
  %234 = vmatprep.subr.bf16.mxu0 %v180
  %235 = vmatpush1.bf16.msra.mxu0 %v179
  %236 = vmatprep.subr.bf16.mxu0 %v182
  %237 = vmatpush1.bf16.msra.mxu0 %v181
  %238 = vmatprep.subr.bf16.mxu0 %v184
  %239 = vmatpush1.bf16.msra.mxu0 %v183
  %240 = vmatprep.subr.bf16.mxu0 %v186
  %241 = vmatpush1.bf16.msra.mxu0 %v185
  %242 = vmatprep.subr.bf16.mxu0 %v188
  %243 = vmatpush1.bf16.msra.mxu0 %v187
  %244 = vmatprep.subr.bf16.mxu0 %v190
  %245 = vmatpush1.bf16.msra.mxu0 %v189
  %246 = vmatprep.subr.bf16.mxu0 %v192
  %247 = vmatpush1.bf16.msra.mxu0 %v191
  %248 = vmatprep.subr.bf16.mxu0 %v194
  %249 = vmatpush1.bf16.msra.mxu0 %v193
  %250 = vmatprep.subr.bf16.mxu0 %v196
  %251 = vmatpush1.bf16.msra.mxu0 %v195
  %252 = vmatprep.subr.bf16.mxu0 %v198
  %253 = vmatpush1.bf16.msra.mxu0 %v197
  %254 = vmatprep.subr.bf16.mxu0 %v200
  %255 = vmatpush1.bf16.msra.mxu0 %v199
  %256 = vmatprep.subr.bf16.mxu0 %v202
  %257 = vmatpush1.bf16.msra.mxu0 %v201
  %258 = vmatprep.subr.bf16.mxu0 0
  %259 = vmatpush1.bf16.msra.mxu0 0
  %260 = vmatprep.subr.bf16.mxu0 0
  %261 = vmatpush1.bf16.msra.mxu0 0
  %262 = vmatprep.subr.bf16.mxu0 0
  %263 = vmatpush1.bf16.msra.mxu0 0
  %264 = vmatprep.subr.bf16.mxu0 0
  %265 = vmatpush1.bf16.msra.mxu0 0
  %266 = vmatprep.mubr.bf16.mxu0 %v229
  %267 = vmatmul.mubr.bf16.gmra.mrb[0].mxu0 %v101
  %v268 = vpop.f32.mrb[0].mxu0
  %v269 = vadd.f32 0.0, %v268
  %v270 = vpop.f32.mrb[0].mxu0
  %v271 = vadd.f32 0.0, %v270
  %v272 = vpop.f32.mrb[0].mxu0
  %v273 = vadd.f32 0.0, %v272
  %v274 = vpop.f32.mrb[0].mxu0
  %v275 = vadd.f32 0.0, %v274
  %276 = vmatprep.mubr.bf16.mxu0 %v232
  %277 = vmatmul.mubr.bf16.gmra.mrb[0].mxu0 %v103
  %v278 = vpop.f32.mrb[0].mxu0
  %v279 = vadd.f32 0.0, %v278
  %v280 = vpop.f32.mrb[0].mxu0
  %v281 = vadd.f32 0.0, %v280
  %v282 = vpop.f32.mrb[0].mxu0
  %v283 = vadd.f32 0.0, %v282
  %v284 = vpop.f32.mrb[0].mxu0
  %v285 = vadd.f32 0.0, %v284
  %286 = vdwg.mxu0
  %v287 = vadd.f32 %v54, %v269
  %v288 = vadd.f32 %v58, %v271
  %v289 = vadd.f32 %v54, %v273
  %v290 = vadd.f32 %v58, %v275
  %v291 = vadd.f32 %v54, %v279
  %v292 = vadd.f32 %v58, %v281
  %v293 = vadd.f32 %v54, %v283
  %v294 = vadd.f32 %v58, %v285
  %v295 = vld [vmem:[%s0] sm:$0xff]
  %v296 = vld [vmem:[%s0 + $0x8] sm:$0xff]
  %v297 = vld [vmem:[%s0 + $0x10] sm:$0x11]
  %v298 = vld [vmem:[%s0 + $0x18] sm:$0xff]
  %v299 = vld [vmem:[%s0 + $0x20] sm:$0xff]
  %v300 = vld [vmem:[%s0 + $0x28] sm:$0x11]
  %vm301 = vsmask.f32 3328
  %vm302 = vsmask.f32 7440
  %vm303 = vmor %vm301, %vm302
  %v305 = vshrl.u32 %v295, 16
  %v307 = vrot.slane %v305, 4
  %v308 = vshll.u32 %v295, 16
  %v310 = vrot.slane %v308, 5
  %v311 = vor.u32 %v307, %v310
  %v312 = vrot.slane %v311, 4
  %v314 = vshll.u32 %v296, 16
  %v316 = vrot.slane %v314, 5
  %v317 = vsel %vm303, %v312, %v316
  %v318 = vshrl.u32 %v296, 16
  %v320 = vrot.slane %v318, 4
  %v321 = vor.u32 %v320, %v316
  %v322 = vrot.slane %v321, 4
  %v324 = vshll.u32 %v297, 16
  %v326 = vrot.slane %v324, 5
  %v327 = vsel %vm303, %v322, %v326
  %v329 = vshrl.u32 %v298, 16
  %v331 = vrot.slane %v329, 4
  %v332 = vshll.u32 %v298, 16
  %v334 = vrot.slane %v332, 5
  %v335 = vor.u32 %v331, %v334
  %v336 = vrot.slane %v335, 4
  %v338 = vshll.u32 %v299, 16
  %v340 = vrot.slane %v338, 5
  %v341 = vsel %vm303, %v336, %v340
  %v342 = vshrl.u32 %v299, 16
  %v344 = vrot.slane %v342, 4
  %v345 = vor.u32 %v344, %v340
  %v346 = vrot.slane %v345, 4
  %v348 = vshll.u32 %v300, 16
  %v350 = vrot.slane %v348, 5
  %v351 = vsel %vm303, %v346, %v350
  %s352 = scalar_lea.vmem %s1, 192
  %v353 = vld [vmem:[%s352] sm:$0xff]
  %v354 = vld [vmem:[%s352 + $0x8] sm:$0xff]
  %v355 = vld [vmem:[%s352 + $0x10] sm:$0xff]
  %v356 = vld [vmem:[%s352 + $0x18] sm:$0xff]
  %v357 = vld [vmem:[%s352 + $0x20] sm:$0xff]
  %v358 = vld [vmem:[%s352 + $0x28] sm:$0xff]
  %v359 = vld [vmem:[%s352 + $0x30] sm:$0xff]
  %v360 = vld [vmem:[%s352 + $0x38] sm:$0xff]
  %v361 = vld [vmem:[%s352 + $0x40] sm:$0xff]
  %v362 = vld [vmem:[%s352 + $0x48] sm:$0xff]
  %v363 = vld [vmem:[%s352 + $0x50] sm:$0xff]
  %v364 = vld [vmem:[%s352 + $0x58] sm:$0xff]
  %v365 = vld [vmem:[%s352 + $0x60] sm:$0xff]
  %v366 = vld [vmem:[%s352 + $0x68] sm:$0xff]
  %v367 = vld [vmem:[%s352 + $0x70] sm:$0xff]
  %v368 = vld [vmem:[%s352 + $0x78] sm:$0xff]
  %v369 = vld [vmem:[%s352 + $0x80] sm:$0xff]
  %v370 = vld [vmem:[%s352 + $0x88] sm:$0xff]
  %v371 = vld [vmem:[%s352 + $0x90] sm:$0xff]
  %v372 = vld [vmem:[%s352 + $0x98] sm:$0xff]
  %v373 = vld [vmem:[%s352 + $0xa0] sm:$0xff]
  %v374 = vld [vmem:[%s352 + $0xa8] sm:$0xff]
  %v375 = vld [vmem:[%s352 + $0xb0] sm:$0xff]
  %v376 = vld [vmem:[%s352 + $0xb8] sm:$0xff]
  %v377 = vunpack.c.l.b16 %v317
  %v378 = vunpack.c.h.b16 %v317
  %v379 = vunpack.c.l.b16 %v327
  %v380 = vunpack.c.h.b16 %v327
  %v381 = vunpack.c.l.b16 %v341
  %v382 = vunpack.c.h.b16 %v341
  %v383 = vunpack.c.l.b16 %v351
  %v384 = vunpack.c.h.b16 %v351
  %v385 = vpack.c.b16 %v379, %v377
  %v386 = vpack.c.b16 %v380, %v378
  %v387 = vpack.c.b16 %v383, %v381
  %v388 = vpack.c.b16 %v384, %v382
  %v415 = vunpack.c.l.b16 %v353
  %v416 = vunpack.c.h.b16 %v353
  %v417 = vunpack.c.l.b16 %v354
  %v418 = vunpack.c.h.b16 %v354
  %v419 = vunpack.c.l.b16 %v355
  %v420 = vunpack.c.h.b16 %v355
  %v421 = vunpack.c.l.b16 %v356
  %v422 = vunpack.c.h.b16 %v356
  %v423 = vunpack.c.l.b16 %v357
  %v424 = vunpack.c.h.b16 %v357
  %v425 = vunpack.c.l.b16 %v358
  %v426 = vunpack.c.h.b16 %v358
  %v427 = vunpack.c.l.b16 %v359
  %v428 = vunpack.c.h.b16 %v359
  %v429 = vunpack.c.l.b16 %v360
  %v430 = vunpack.c.h.b16 %v360
  %v431 = vunpack.c.l.b16 %v361
  %v432 = vunpack.c.h.b16 %v361
  %v433 = vunpack.c.l.b16 %v362
  %v434 = vunpack.c.h.b16 %v362
  %v435 = vunpack.c.l.b16 %v363
  %v436 = vunpack.c.h.b16 %v363
  %v437 = vunpack.c.l.b16 %v364
  %v438 = vunpack.c.h.b16 %v364
  %v439 = vunpack.c.l.b16 %v365
  %v440 = vunpack.c.h.b16 %v365
  %v441 = vunpack.c.l.b16 %v366
  %v442 = vunpack.c.h.b16 %v366
  %v443 = vunpack.c.l.b16 %v367
  %v444 = vunpack.c.h.b16 %v367
  %v445 = vunpack.c.l.b16 %v368
  %v446 = vunpack.c.h.b16 %v368
  %v447 = vunpack.c.l.b16 %v369
  %v448 = vunpack.c.h.b16 %v369
  %v449 = vunpack.c.l.b16 %v370
  %v450 = vunpack.c.h.b16 %v370
  %v451 = vunpack.c.l.b16 %v371
  %v452 = vunpack.c.h.b16 %v371
  %v453 = vunpack.c.l.b16 %v372
  %v454 = vunpack.c.h.b16 %v372
  %v455 = vunpack.c.l.b16 %v373
  %v456 = vunpack.c.h.b16 %v373
  %v457 = vunpack.c.l.b16 %v374
  %v458 = vunpack.c.h.b16 %v374
  %v459 = vunpack.c.l.b16 %v375
  %v460 = vunpack.c.h.b16 %v375
  %v461 = vunpack.c.l.b16 %v376
  %v462 = vunpack.c.h.b16 %v376
  %v463 = vpack.c.b16 %v417, %v415
  %v464 = vpack.c.b16 %v418, %v416
  %v465 = vpack.c.b16 %v421, %v419
  %v466 = vpack.c.b16 %v422, %v420
  %v467 = vpack.c.b16 %v425, %v423
  %v468 = vpack.c.b16 %v426, %v424
  %v469 = vpack.c.b16 %v429, %v427
  %v470 = vpack.c.b16 %v430, %v428
  %v471 = vpack.c.b16 %v433, %v431
  %v472 = vpack.c.b16 %v434, %v432
  %v473 = vpack.c.b16 %v437, %v435
  %v474 = vpack.c.b16 %v438, %v436
  %v475 = vpack.c.b16 %v441, %v439
  %v476 = vpack.c.b16 %v442, %v440
  %v477 = vpack.c.b16 %v445, %v443
  %v478 = vpack.c.b16 %v446, %v444
  %v479 = vpack.c.b16 %v449, %v447
  %v480 = vpack.c.b16 %v450, %v448
  %v481 = vpack.c.b16 %v453, %v451
  %v482 = vpack.c.b16 %v454, %v452
  %v483 = vpack.c.b16 %v457, %v455
  %v484 = vpack.c.b16 %v458, %v456
  %v485 = vpack.c.b16 %v461, %v459
  %v486 = vpack.c.b16 %v462, %v460
  %v512 = vsel %vm227, %v386, 0
  %v515 = vsel %vm227, %v388, 0
  %517 = vmatprep.subr.bf16.mxu0 %v464
  %518 = vmatpush1.bf16.msra.mxu0 %v463
  %519 = vmatprep.subr.bf16.mxu0 %v466
  %520 = vmatpush1.bf16.msra.mxu0 %v465
  %521 = vmatprep.subr.bf16.mxu0 %v468
  %522 = vmatpush1.bf16.msra.mxu0 %v467
  %523 = vmatprep.subr.bf16.mxu0 %v470
  %524 = vmatpush1.bf16.msra.mxu0 %v469
  %525 = vmatprep.subr.bf16.mxu0 %v472
  %526 = vmatpush1.bf16.msra.mxu0 %v471
  %527 = vmatprep.subr.bf16.mxu0 %v474
  %528 = vmatpush1.bf16.msra.mxu0 %v473
  %529 = vmatprep.subr.bf16.mxu0 %v476
  %530 = vmatpush1.bf16.msra.mxu0 %v475
  %531 = vmatprep.subr.bf16.mxu0 %v478
  %532 = vmatpush1.bf16.msra.mxu0 %v477
  %533 = vmatprep.subr.bf16.mxu0 %v480
  %534 = vmatpush1.bf16.msra.mxu0 %v479
  %535 = vmatprep.subr.bf16.mxu0 %v482
  %536 = vmatpush1.bf16.msra.mxu0 %v481
  %537 = vmatprep.subr.bf16.mxu0 %v484
  %538 = vmatpush1.bf16.msra.mxu0 %v483
  %539 = vmatprep.subr.bf16.mxu0 %v486
  %540 = vmatpush1.bf16.msra.mxu0 %v485
  %541 = vmatprep.subr.bf16.mxu0 0
  %542 = vmatpush1.bf16.msra.mxu0 0
  %543 = vmatprep.subr.bf16.mxu0 0
  %544 = vmatpush1.bf16.msra.mxu0 0
  %545 = vmatprep.subr.bf16.mxu0 0
  %546 = vmatpush1.bf16.msra.mxu0 0
  %547 = vmatprep.subr.bf16.mxu0 0
  %548 = vmatpush1.bf16.msra.mxu0 0
  %549 = vmatprep.mubr.bf16.mxu0 %v512
  %550 = vmatmul.mubr.bf16.gmra.mrb[0].mxu0 %v385
  %v551 = vpop.f32.mrb[0].mxu0
  %v552 = vadd.f32 0.0, %v551
  %v553 = vpop.f32.mrb[0].mxu0
  %v554 = vadd.f32 0.0, %v553
  %v555 = vpop.f32.mrb[0].mxu0
  %v556 = vadd.f32 0.0, %v555
  %v557 = vpop.f32.mrb[0].mxu0
  %v558 = vadd.f32 0.0, %v557
  %559 = vmatprep.mubr.bf16.mxu0 %v515
  %560 = vmatmul.mubr.bf16.gmra.mrb[0].mxu0 %v387
  %v561 = vpop.f32.mrb[0].mxu0
  %v562 = vadd.f32 0.0, %v561
  %v563 = vpop.f32.mrb[0].mxu0
  %v564 = vadd.f32 0.0, %v563
  %v565 = vpop.f32.mrb[0].mxu0
  %v566 = vadd.f32 0.0, %v565
  %v567 = vpop.f32.mrb[0].mxu0
  %v568 = vadd.f32 0.0, %v567
  %569 = vdwg.mxu0
  %v570 = vadd.f32 %v287, %v552
  %v571 = vadd.f32 %v288, %v554
  %v572 = vadd.f32 %v289, %v556
  %v573 = vadd.f32 %v290, %v558
  %v574 = vadd.f32 %v291, %v562
  %v575 = vadd.f32 %v292, %v564
  %v576 = vadd.f32 %v293, %v566
  %v577 = vadd.f32 %v294, %v568
  %v578 = vld [vmem:[%s0] sm:$0xee]
  %v579 = vld [vmem:[%s0 + $0x18] sm:$0xee]
  %vm586 = vcmask 1042432
  %vm587 = vcmask 1046532
  %vm588 = vmor %vm586, %vm587
  %v589 = vrot.slane %v578, 5
  %v590 = vrot.slane %v589, 4
  %v591 = vrot.slane %v296, 5
  %v592 = vsel %vm588, %v590, %v591
  %v593 = vrot.slane %v591, 4
  %v594 = vrot.slane %v297, 5
  %v595 = vsel %vm588, %v593, %v594
  %v596 = vrot.slane %v579, 5
  %v597 = vrot.slane %v596, 4
  %v598 = vrot.slane %v299, 5
  %v599 = vsel %vm588, %v597, %v598
  %v600 = vrot.slane %v598, 4
  %v601 = vrot.slane %v300, 5
  %v602 = vsel %vm588, %v600, %v601
  %s603 = scalar_lea.vmem %s1, 384
  %v604 = vld [vmem:[%s603] sm:$0xff]
  %v605 = vld [vmem:[%s603 + $0x8] sm:$0xff]
  %v606 = vld [vmem:[%s603 + $0x10] sm:$0xff]
  %v607 = vld [vmem:[%s603 + $0x18] sm:$0xff]
  %v608 = vld [vmem:[%s603 + $0x20] sm:$0xff]
  %v609 = vld [vmem:[%s603 + $0x28] sm:$0xff]
  %v610 = vld [vmem:[%s603 + $0x30] sm:$0xff]
  %v611 = vld [vmem:[%s603 + $0x38] sm:$0xff]
  %v612 = vld [vmem:[%s603 + $0x40] sm:$0xff]
  %v613 = vld [vmem:[%s603 + $0x48] sm:$0xff]
  %v614 = vld [vmem:[%s603 + $0x50] sm:$0xff]
  %v615 = vld [vmem:[%s603 + $0x58] sm:$0xff]
  %v616 = vld [vmem:[%s603 + $0x60] sm:$0xff]
  %v617 = vld [vmem:[%s603 + $0x68] sm:$0xff]
  %v618 = vld [vmem:[%s603 + $0x70] sm:$0xff]
  %v619 = vld [vmem:[%s603 + $0x78] sm:$0xff]
  %v620 = vld [vmem:[%s603 + $0x80] sm:$0xff]
  %v621 = vld [vmem:[%s603 + $0x88] sm:$0xff]
  %v622 = vld [vmem:[%s603 + $0x90] sm:$0xff]
  %v623 = vld [vmem:[%s603 + $0x98] sm:$0xff]
  %v624 = vld [vmem:[%s603 + $0xa0] sm:$0xff]
  %v625 = vld [vmem:[%s603 + $0xa8] sm:$0xff]
  %v626 = vld [vmem:[%s603 + $0xb0] sm:$0xff]
  %v627 = vld [vmem:[%s603 + $0xb8] sm:$0xff]
  %v628 = vunpack.c.l.b16 %v592
  %v629 = vunpack.c.h.b16 %v592
  %v630 = vunpack.c.l.b16 %v595
  %v631 = vunpack.c.h.b16 %v595
  %v632 = vunpack.c.l.b16 %v599
  %v633 = vunpack.c.h.b16 %v599
  %v634 = vunpack.c.l.b16 %v602
  %v635 = vunpack.c.h.b16 %v602
  %v636 = vpack.c.b16 %v630, %v628
  %v637 = vpack.c.b16 %v631, %v629
  %v638 = vpack.c.b16 %v634, %v632
  %v639 = vpack.c.b16 %v635, %v633
  %v666 = vunpack.c.l.b16 %v604
  %v667 = vunpack.c.h.b16 %v604
  %v668 = vunpack.c.l.b16 %v605
  %v669 = vunpack.c.h.b16 %v605
  %v670 = vunpack.c.l.b16 %v606
  %v671 = vunpack.c.h.b16 %v606
  %v672 = vunpack.c.l.b16 %v607
  %v673 = vunpack.c.h.b16 %v607
  %v674 = vunpack.c.l.b16 %v608
  %v675 = vunpack.c.h.b16 %v608
  %v676 = vunpack.c.l.b16 %v609
  %v677 = vunpack.c.h.b16 %v609
  %v678 = vunpack.c.l.b16 %v610
  %v679 = vunpack.c.h.b16 %v610
  %v680 = vunpack.c.l.b16 %v611
  %v681 = vunpack.c.h.b16 %v611
  %v682 = vunpack.c.l.b16 %v612
  %v683 = vunpack.c.h.b16 %v612
  %v684 = vunpack.c.l.b16 %v613
  %v685 = vunpack.c.h.b16 %v613
  %v686 = vunpack.c.l.b16 %v614
  %v687 = vunpack.c.h.b16 %v614
  %v688 = vunpack.c.l.b16 %v615
  %v689 = vunpack.c.h.b16 %v615
  %v690 = vunpack.c.l.b16 %v616
  %v691 = vunpack.c.h.b16 %v616
  %v692 = vunpack.c.l.b16 %v617
  %v693 = vunpack.c.h.b16 %v617
  %v694 = vunpack.c.l.b16 %v618
  %v695 = vunpack.c.h.b16 %v618
  %v696 = vunpack.c.l.b16 %v619
  %v697 = vunpack.c.h.b16 %v619
  %v698 = vunpack.c.l.b16 %v620
  %v699 = vunpack.c.h.b16 %v620
  %v700 = vunpack.c.l.b16 %v621
  %v701 = vunpack.c.h.b16 %v621
  %v702 = vunpack.c.l.b16 %v622
  %v703 = vunpack.c.h.b16 %v622
  %v704 = vunpack.c.l.b16 %v623
  %v705 = vunpack.c.h.b16 %v623
  %v706 = vunpack.c.l.b16 %v624
  %v707 = vunpack.c.h.b16 %v624
  %v708 = vunpack.c.l.b16 %v625
  %v709 = vunpack.c.h.b16 %v625
  %v710 = vunpack.c.l.b16 %v626
  %v711 = vunpack.c.h.b16 %v626
  %v712 = vunpack.c.l.b16 %v627
  %v713 = vunpack.c.h.b16 %v627
  %v714 = vpack.c.b16 %v668, %v666
  %v715 = vpack.c.b16 %v669, %v667
  %v716 = vpack.c.b16 %v672, %v670
  %v717 = vpack.c.b16 %v673, %v671
  %v718 = vpack.c.b16 %v676, %v674
  %v719 = vpack.c.b16 %v677, %v675
  %v720 = vpack.c.b16 %v680, %v678
  %v721 = vpack.c.b16 %v681, %v679
  %v722 = vpack.c.b16 %v684, %v682
  %v723 = vpack.c.b16 %v685, %v683
  %v724 = vpack.c.b16 %v688, %v686
  %v725 = vpack.c.b16 %v689, %v687
  %v726 = vpack.c.b16 %v692, %v690
  %v727 = vpack.c.b16 %v693, %v691
  %v728 = vpack.c.b16 %v696, %v694
  %v729 = vpack.c.b16 %v697, %v695
  %v730 = vpack.c.b16 %v700, %v698
  %v731 = vpack.c.b16 %v701, %v699
  %v732 = vpack.c.b16 %v704, %v702
  %v733 = vpack.c.b16 %v705, %v703
  %v734 = vpack.c.b16 %v708, %v706
  %v735 = vpack.c.b16 %v709, %v707
  %v736 = vpack.c.b16 %v712, %v710
  %v737 = vpack.c.b16 %v713, %v711
  %v763 = vsel %vm227, %v637, 0
  %v766 = vsel %vm227, %v639, 0
  %768 = vmatprep.subr.bf16.mxu0 %v715
  %769 = vmatpush1.bf16.msra.mxu0 %v714
  %770 = vmatprep.subr.bf16.mxu0 %v717
  %771 = vmatpush1.bf16.msra.mxu0 %v716
  %772 = vmatprep.subr.bf16.mxu0 %v719
  %773 = vmatpush1.bf16.msra.mxu0 %v718
  %774 = vmatprep.subr.bf16.mxu0 %v721
  %775 = vmatpush1.bf16.msra.mxu0 %v720
  %776 = vmatprep.subr.bf16.mxu0 %v723
  %777 = vmatpush1.bf16.msra.mxu0 %v722
  %778 = vmatprep.subr.bf16.mxu0 %v725
  %779 = vmatpush1.bf16.msra.mxu0 %v724
  %780 = vmatprep.subr.bf16.mxu0 %v727
  %781 = vmatpush1.bf16.msra.mxu0 %v726
  %782 = vmatprep.subr.bf16.mxu0 %v729
  %783 = vmatpush1.bf16.msra.mxu0 %v728
  %784 = vmatprep.subr.bf16.mxu0 %v731
  %785 = vmatpush1.bf16.msra.mxu0 %v730
  %786 = vmatprep.subr.bf16.mxu0 %v733
  %787 = vmatpush1.bf16.msra.mxu0 %v732
  %788 = vmatprep.subr.bf16.mxu0 %v735
  %789 = vmatpush1.bf16.msra.mxu0 %v734
  %790 = vmatprep.subr.bf16.mxu0 %v737
  %791 = vmatpush1.bf16.msra.mxu0 %v736
  %792 = vmatprep.subr.bf16.mxu0 0
  %793 = vmatpush1.bf16.msra.mxu0 0
  %794 = vmatprep.subr.bf16.mxu0 0
  %795 = vmatpush1.bf16.msra.mxu0 0
  %796 = vmatprep.subr.bf16.mxu0 0
  %797 = vmatpush1.bf16.msra.mxu0 0
  %798 = vmatprep.subr.bf16.mxu0 0
  %799 = vmatpush1.bf16.msra.mxu0 0
  %800 = vmatprep.mubr.bf16.mxu0 %v763
  %801 = vmatmul.mubr.bf16.gmra.mrb[0].mxu0 %v636
  %v802 = vpop.f32.mrb[0].mxu0
  %v803 = vadd.f32 0.0, %v802
  %v804 = vpop.f32.mrb[0].mxu0
  %v805 = vadd.f32 0.0, %v804
  %v806 = vpop.f32.mrb[0].mxu0
  %v807 = vadd.f32 0.0, %v806
  %v808 = vpop.f32.mrb[0].mxu0
  %v809 = vadd.f32 0.0, %v808
  %810 = vmatprep.mubr.bf16.mxu0 %v766
  %811 = vmatmul.mubr.bf16.gmra.mrb[0].mxu0 %v638
  %v812 = vpop.f32.mrb[0].mxu0
  %v813 = vadd.f32 0.0, %v812
  %v814 = vpop.f32.mrb[0].mxu0
  %v815 = vadd.f32 0.0, %v814
  %v816 = vpop.f32.mrb[0].mxu0
  %v817 = vadd.f32 0.0, %v816
  %v818 = vpop.f32.mrb[0].mxu0
  %v819 = vadd.f32 0.0, %v818
  %820 = vdwg.mxu0
  %v821 = vadd.f32 %v570, %v803
  %v822 = vadd.f32 %v571, %v805
  %v823 = vadd.f32 %v572, %v807
  %v824 = vadd.f32 %v573, %v809
  %v825 = vadd.f32 %v574, %v813
  %v826 = vadd.f32 %v575, %v815
  %v827 = vadd.f32 %v576, %v817
  %v828 = vadd.f32 %v577, %v819
  %v829 = vpack.c.bf16 %v823, %v821
  %v830 = vpack.c.bf16 %v824, %v822
  %v831 = vpack.c.bf16 %v827, %v825
  %v832 = vpack.c.bf16 %v828, %v826
  %v837 = vunpack.c.l.b16 %v829
  %v838 = vunpack.c.l.b16 %v830
  %v839 = vunpack.c.h.b16 %v829
  %v840 = vunpack.c.h.b16 %v830
  %v841 = vunpack.c.l.b16 %v831
  %v842 = vunpack.c.l.b16 %v832
  %v843 = vunpack.c.h.b16 %v831
  %v844 = vunpack.c.h.b16 %v832
  %v845 = vpack.c.b16 %v838, %v837
  %v846 = vpack.c.b16 %v840, %v839
  %v847 = vpack.c.b16 %v842, %v841
  %v848 = vpack.c.b16 %v844, %v843
  %vm849 = vsmask.f32 256
  %vm850 = vsmask.f32 4368
  %vm851 = vmor %vm849, %vm850
  %v853 = vshrl.u32 %v845, 16
  %v855 = vrot.slane %v853, 7
  %v856 = vshll.u32 %v845, 16
  %v858 = vor.u32 %v855, %v856
  %v859 = vrot.slane %v855, 4
  %v861 = vshrl.u32 %v846, 16
  %v863 = vrot.slane %v861, 7
  %v864 = vshll.u32 %v846, 16
  %v866 = vor.u32 %v863, %v864
  %v867 = vsel %vm851, %v859, %v866
  %v868 = vrot.slane %v863, 4
  %v870 = vshrl.u32 %v847, 16
  %v872 = vrot.slane %v870, 7
  %v873 = vshll.u32 %v847, 16
  %v875 = vor.u32 %v872, %v873
  %v876 = vrot.slane %v872, 4
  %v878 = vshrl.u32 %v848, 16
  %v880 = vrot.slane %v878, 7
  %v881 = vshll.u32 %v848, 16
  %v883 = vor.u32 %v880, %v881
  %v884 = vsel %vm851, %v876, %v883
  %v885 = vrot.slane %v880, 4
  %vm892 = vcmask 1043456
  %vm893 = vsmask.f32 7938
  %vm894 = vmand %vm892, %vm893
  %vm895 = vcmask 1047556
  %vm896 = vsmask.f32 7954
  %vm897 = vmand %vm895, %vm896
  %vm898 = vmor %vm897, %vm894
  %v899 = vld [vmem:[#allocation2] sm:$0xff]
  %v900 = vsel %vm898, %v858, %v899
  %901 = vst [vmem:[#allocation2] sm:$0xff] %v900
  %902 = vst [vmem:[#allocation2 + $0x8] sm:$0xff] %v867
  %vm903 = vcmask 1040384
  %vm904 = vmand %vm903, %vm849
  %vm905 = vcmask 1044484
  %vm906 = vsmask.f32 4352
  %vm907 = vmand %vm905, %vm906
  %vm908 = vmor %vm907, %vm904
  %v909 = vld [vmem:[#allocation2 + $0x10] sm:$0x11]
  %v910 = vsel %vm908, %v868, %v909
  %911 = vst [vmem:[#allocation2 + $0x10] sm:$0x11] %v910
  %v912 = vld [vmem:[#allocation2 + $0x18] sm:$0xff]
  %v913 = vsel %vm898, %v875, %v912
  %914 = vst [vmem:[#allocation2 + $0x18] sm:$0xff] %v913
  %915 = vst [vmem:[#allocation2 + $0x20] sm:$0xff] %v884
  %v916 = vld [vmem:[#allocation2 + $0x28] sm:$0x11]
  %v917 = vsel %vm908, %v885, %v916
  %918 = vst [vmem:[#allocation2 + $0x28] sm:$0x11] %v917
  %v919 = vld [vmem:[%s4] sm:$0x1]
  %v921 = vlaneseq
  %v922 = vshrl.u32 %v921, 7
  %v923 = vsub.s32 0, %v922
  %v924 = vrot.slane %v919, %v923
  %v926 = vld [vmem:[#allocation2] sm:$0xff]
  %v927 = vld [vmem:[#allocation2 + $0x8] sm:$0xff]
  %v928 = vld [vmem:[#allocation2 + $0x18] sm:$0xff]
  %v929 = vld [vmem:[#allocation2 + $0x20] sm:$0xff]
  %v930 = vld [vmem:[%s3] sm:$0xf]
  %v931 = vld [vmem:[%s3 + $0x4] sm:$0xf]
  %v932 = vld [vmem:[%s3 + $0x8] sm:$0xf]
  %v933 = vld [vmem:[%s3 + $0xc] sm:$0xf]
  %v934 = vld [vmem:[%s3 + $0x10] sm:$0xf]
  %v935 = vld [vmem:[%s3 + $0x14] sm:$0xf]
  %v936 = vld [vmem:[%s3 + $0x18] sm:$0xf]
  %v937 = vld [vmem:[%s3 + $0x1c] sm:$0xf]
  %v938 = vld [vmem:[%s3 + $0x20] sm:$0xf]
  %v939 = vld [vmem:[%s3 + $0x24] sm:$0xf]
  %v940 = vld [vmem:[%s3 + $0x28] sm:$0xf]
  %v941 = vld [vmem:[%s3 + $0x2c] sm:$0xf]
  %v942 = vld [vmem:[%s3 + $0x30] sm:$0xf]
  %v943 = vld [vmem:[%s3 + $0x34] sm:$0xf]
  %v944 = vld [vmem:[%s3 + $0x38] sm:$0xf]
  %v945 = vld [vmem:[%s3 + $0x3c] sm:$0xf]
  %v946 = vld [vmem:[%s3 + $0x40] sm:$0xf]
  %v947 = vld [vmem:[%s3 + $0x44] sm:$0xf]
  %v948 = vld [vmem:[%s3 + $0x48] sm:$0xf]
  %v949 = vld [vmem:[%s3 + $0x4c] sm:$0xf]
  %v950 = vld [vmem:[%s3 + $0x50] sm:$0xf]
  %v951 = vld [vmem:[%s3 + $0x54] sm:$0xf]
  %v952 = vld [vmem:[%s3 + $0x58] sm:$0xf]
  %v953 = vld [vmem:[%s3 + $0x5c] sm:$0xf]
  %v954 = vld [vmem:[%s3 + $0x60] sm:$0xf]
  %v955 = vld [vmem:[%s3 + $0x64] sm:$0xf]
  %v956 = vld [vmem:[%s3 + $0x68] sm:$0xf]
  %v957 = vld [vmem:[%s3 + $0x6c] sm:$0xf]
  %v958 = vld [vmem:[%s3 + $0x70] sm:$0xf]
  %v959 = vld [vmem:[%s3 + $0x74] sm:$0xf]
  %v960 = vld [vmem:[%s3 + $0x78] sm:$0xf]
  %v961 = vld [vmem:[%s3 + $0x7c] sm:$0xf]
  %v966 = vunpack.c.l.b16 %v926
  %v967 = vunpack.c.h.b16 %v926
  %v968 = vunpack.c.l.b16 %v927
  %v969 = vunpack.c.h.b16 %v927
  %v970 = vunpack.c.l.b16 %v928
  %v971 = vunpack.c.h.b16 %v928
  %v972 = vunpack.c.l.b16 %v929
  %v973 = vunpack.c.h.b16 %v929
  %v974 = vpack.c.b16 %v968, %v966
  %v975 = vpack.c.b16 %v969, %v967
  %v976 = vpack.c.b16 %v972, %v970
  %v977 = vpack.c.b16 %v973, %v971
  %v1014 = vunpack.c.l.b16 %v930
  %v1015 = vunpack.c.l.b16 %v931
  %v1016 = vunpack.c.l.b16 %v932
  %v1017 = vunpack.c.l.b16 %v933
  %v1018 = vunpack.c.l.b16 %v934
  %v1019 = vunpack.c.l.b16 %v935
  %v1020 = vunpack.c.l.b16 %v936
  %v1021 = vunpack.c.l.b16 %v937
  %v1022 = vunpack.c.l.b16 %v938
  %v1023 = vunpack.c.l.b16 %v939
  %v1024 = vunpack.c.l.b16 %v940
  %v1025 = vunpack.c.l.b16 %v941
  %v1026 = vunpack.c.l.b16 %v942
  %v1027 = vunpack.c.l.b16 %v943
  %v1028 = vunpack.c.l.b16 %v944
  %v1029 = vunpack.c.l.b16 %v945
  %v1030 = vunpack.c.l.b16 %v946
  %v1031 = vunpack.c.l.b16 %v947
  %v1032 = vunpack.c.l.b16 %v948
  %v1033 = vunpack.c.l.b16 %v949
  %v1034 = vunpack.c.l.b16 %v950
  %v1035 = vunpack.c.l.b16 %v951
  %v1036 = vunpack.c.l.b16 %v952
  %v1037 = vunpack.c.l.b16 %v953
  %v1038 = vunpack.c.l.b16 %v954
  %v1039 = vunpack.c.l.b16 %v955
  %v1040 = vunpack.c.l.b16 %v956
  %v1041 = vunpack.c.l.b16 %v957
  %v1042 = vunpack.c.l.b16 %v958
  %v1043 = vunpack.c.l.b16 %v959
  %v1044 = vunpack.c.l.b16 %v960
  %v1045 = vunpack.c.l.b16 %v961
  %v1046 = vpack.c.b16 %v1015, %v1014
  %v1047 = vpack.c.b16 %v1017, %v1016
  %v1048 = vpack.c.b16 %v1019, %v1018
  %v1049 = vpack.c.b16 %v1021, %v1020
  %v1050 = vpack.c.b16 %v1023, %v1022
  %v1051 = vpack.c.b16 %v1025, %v1024
  %v1052 = vpack.c.b16 %v1027, %v1026
  %v1053 = vpack.c.b16 %v1029, %v1028
  %v1054 = vpack.c.b16 %v1031, %v1030
  %v1055 = vpack.c.b16 %v1033, %v1032
  %v1056 = vpack.c.b16 %v1035, %v1034
  %v1057 = vpack.c.b16 %v1037, %v1036
  %v1058 = vpack.c.b16 %v1039, %v1038
  %v1059 = vpack.c.b16 %v1041, %v1040
  %v1060 = vpack.c.b16 %v1043, %v1042
  %v1061 = vpack.c.b16 %v1045, %v1044
  %1078 = vmatprep.subr.bf16.mxu0 0
  %1079 = vmatpush1.bf16.msra.mxu0 %v1046
  %1080 = vmatprep.subr.bf16.mxu0 0
  %1081 = vmatpush1.bf16.msra.mxu0 %v1047
  %1082 = vmatprep.subr.bf16.mxu0 0
  %1083 = vmatpush1.bf16.msra.mxu0 %v1048
  %1084 = vmatprep.subr.bf16.mxu0 0
  %1085 = vmatpush1.bf16.msra.mxu0 %v1049
  %1086 = vmatprep.subr.bf16.mxu0 0
  %1087 = vmatpush1.bf16.msra.mxu0 %v1050
  %1088 = vmatprep.subr.bf16.mxu0 0
  %1089 = vmatpush1.bf16.msra.mxu0 %v1051
  %1090 = vmatprep.subr.bf16.mxu0 0
  %1091 = vmatpush1.bf16.msra.mxu0 %v1052
  %1092 = vmatprep.subr.bf16.mxu0 0
  %1093 = vmatpush1.bf16.msra.mxu0 %v1053
  %1094 = vmatprep.subr.bf16.mxu0 0
  %1095 = vmatpush1.bf16.msra.mxu0 %v1054
  %1096 = vmatprep.subr.bf16.mxu0 0
  %1097 = vmatpush1.bf16.msra.mxu0 %v1055
  %1098 = vmatprep.subr.bf16.mxu0 0
  %1099 = vmatpush1.bf16.msra.mxu0 %v1056
  %1100 = vmatprep.subr.bf16.mxu0 0
  %1101 = vmatpush1.bf16.msra.mxu0 %v1057
  %1102 = vmatprep.subr.bf16.mxu0 0
  %1103 = vmatpush1.bf16.msra.mxu0 %v1058
  %1104 = vmatprep.subr.bf16.mxu0 0
  %1105 = vmatpush1.bf16.msra.mxu0 %v1059
  %1106 = vmatprep.subr.bf16.mxu0 0
  %1107 = vmatpush1.bf16.msra.mxu0 %v1060
  %1108 = vmatprep.subr.bf16.mxu0 0
  %1109 = vmatpush1.bf16.msra.mxu0 %v1061
  %1110 = vmatprep.mubr.bf16.mxu0 %v975
  %1111 = vmatmul.mubr.bf16.gmra.mrb[0].mxu0 %v974
  %v1112 = vpop.f32.mrb[0].mxu0
  %v1113 = vadd.f32 0.0, %v1112
  %v1114 = vpop.f32.mrb[0].mxu0
  %v1115 = vpop.f32.mrb[0].mxu0
  %v1116 = vadd.f32 0.0, %v1115
  %v1117 = vpop.f32.mrb[0].mxu0
  %1118 = vmatprep.mubr.bf16.mxu0 %v977
  %1119 = vmatmul.mubr.bf16.gmra.mrb[0].mxu0 %v976
  %v1120 = vpop.f32.mrb[0].mxu0
  %v1121 = vadd.f32 0.0, %v1120
  %v1122 = vpop.f32.mrb[0].mxu0
  %v1123 = vpop.f32.mrb[0].mxu0
  %v1124 = vadd.f32 0.0, %v1123
  %v1125 = vpop.f32.mrb[0].mxu0
  %1126 = vdwg.mxu0
  %v1127 = vadd.f32 %v924, %v1113
  %v1128 = vadd.f32 %v924, %v1116
  %v1129 = vadd.f32 %v924, %v1121
  %v1130 = vadd.f32 %v924, %v1124
  %v1131 = vld [vmem:[#allocation2] sm:$0xff]
  %v1132 = vld [vmem:[#allocation2 + $0x8] sm:$0xff]
  %v1133 = vld [vmem:[#allocation2 + $0x10] sm:$0x11]
  %v1134 = vld [vmem:[#allocation2 + $0x18] sm:$0xff]
  %v1135 = vld [vmem:[#allocation2 + $0x20] sm:$0xff]
  %v1136 = vld [vmem:[#allocation2 + $0x28] sm:$0x11]
  %v1138 = vshrl.u32 %v1131, 16
  %v1140 = vrot.slane %v1138, 4
  %v1141 = vshll.u32 %v1131, 16
  %v1143 = vrot.slane %v1141, 5
  %v1144 = vor.u32 %v1140, %v1143
  %v1145 = vrot.slane %v1144, 4
  %v1147 = vshll.u32 %v1132, 16
  %v1149 = vrot.slane %v1147, 5
  %v1150 = vsel %vm303, %v1145, %v1149
  %v1151 = vshrl.u32 %v1132, 16
  %v1153 = vrot.slane %v1151, 4
  %v1154 = vor.u32 %v1153, %v1149
  %v1155 = vrot.slane %v1154, 4
  %v1157 = vshll.u32 %v1133, 16
  %v1159 = vrot.slane %v1157, 5
  %v1160 = vsel %vm303, %v1155, %v1159
  %v1162 = vshrl.u32 %v1134, 16
  %v1164 = vrot.slane %v1162, 4
  %v1165 = vshll.u32 %v1134, 16
  %v1167 = vrot.slane %v1165, 5
  %v1168 = vor.u32 %v1164, %v1167
  %v1169 = vrot.slane %v1168, 4
  %v1171 = vshll.u32 %v1135, 16
  %v1173 = vrot.slane %v1171, 5
  %v1174 = vsel %vm303, %v1169, %v1173
  %v1175 = vshrl.u32 %v1135, 16
  %v1177 = vrot.slane %v1175, 4
  %v1178 = vor.u32 %v1177, %v1173
  %v1179 = vrot.slane %v1178, 4
  %v1181 = vshll.u32 %v1136, 16
  %v1183 = vrot.slane %v1181, 5
  %v1184 = vsel %vm303, %v1179, %v1183
  %s1185 = scalar_lea.vmem %s3, 128
  %v1186 = vld [vmem:[%s1185] sm:$0xf]
  %v1187 = vld [vmem:[%s1185 + $0x4] sm:$0xf]
  %v1188 = vld [vmem:[%s1185 + $0x8] sm:$0xf]
  %v1189 = vld [vmem:[%s1185 + $0xc] sm:$0xf]
  %v1190 = vld [vmem:[%s1185 + $0x10] sm:$0xf]
  %v1191 = vld [vmem:[%s1185 + $0x14] sm:$0xf]
  %v1192 = vld [vmem:[%s1185 + $0x18] sm:$0xf]
  %v1193 = vld [vmem:[%s1185 + $0x1c] sm:$0xf]
  %v1194 = vld [vmem:[%s1185 + $0x20] sm:$0xf]
  %v1195 = vld [vmem:[%s1185 + $0x24] sm:$0xf]
  %v1196 = vld [vmem:[%s1185 + $0x28] sm:$0xf]
  %v1197 = vld [vmem:[%s1185 + $0x2c] sm:$0xf]
  %v1198 = vld [vmem:[%s1185 + $0x30] sm:$0xf]
  %v1199 = vld [vmem:[%s1185 + $0x34] sm:$0xf]
  %v1200 = vld [vmem:[%s1185 + $0x38] sm:$0xf]
  %v1201 = vld [vmem:[%s1185 + $0x3c] sm:$0xf]
  %v1202 = vld [vmem:[%s1185 + $0x40] sm:$0xf]
  %v1203 = vld [vmem:[%s1185 + $0x44] sm:$0xf]
  %v1204 = vld [vmem:[%s1185 + $0x48] sm:$0xf]
  %v1205 = vld [vmem:[%s1185 + $0x4c] sm:$0xf]
  %v1206 = vld [vmem:[%s1185 + $0x50] sm:$0xf]
  %v1207 = vld [vmem:[%s1185 + $0x54] sm:$0xf]
  %v1208 = vld [vmem:[%s1185 + $0x58] sm:$0xf]
  %v1209 = vld [vmem:[%s1185 + $0x5c] sm:$0xf]
  %v1210 = vld [vmem:[%s1185 + $0x60] sm:$0xf]
  %v1211 = vld [vmem:[%s1185 + $0x64] sm:$0xf]
  %v1212 = vld [vmem:[%s1185 + $0x68] sm:$0xf]
  %v1213 = vld [vmem:[%s1185 + $0x6c] sm:$0xf]
  %v1214 = vld [vmem:[%s1185 + $0x70] sm:$0xf]
  %v1215 = vld [vmem:[%s1185 + $0x74] sm:$0xf]
  %v1216 = vld [vmem:[%s1185 + $0x78] sm:$0xf]
  %v1217 = vld [vmem:[%s1185 + $0x7c] sm:$0xf]
  %v1218 = vunpack.c.l.b16 %v1150
  %v1219 = vunpack.c.h.b16 %v1150
  %v1220 = vunpack.c.l.b16 %v1160
  %v1221 = vunpack.c.h.b16 %v1160
  %v1222 = vunpack.c.l.b16 %v1174
  %v1223 = vunpack.c.h.b16 %v1174
  %v1224 = vunpack.c.l.b16 %v1184
  %v1225 = vunpack.c.h.b16 %v1184
  %v1226 = vpack.c.b16 %v1220, %v1218
  %v1227 = vpack.c.b16 %v1221, %v1219
  %v1228 = vpack.c.b16 %v1224, %v1222
  %v1229 = vpack.c.b16 %v1225, %v1223
  %v1266 = vunpack.c.l.b16 %v1186
  %v1267 = vunpack.c.l.b16 %v1187
  %v1268 = vunpack.c.l.b16 %v1188
  %v1269 = vunpack.c.l.b16 %v1189
  %v1270 = vunpack.c.l.b16 %v1190
  %v1271 = vunpack.c.l.b16 %v1191
  %v1272 = vunpack.c.l.b16 %v1192
  %v1273 = vunpack.c.l.b16 %v1193
  %v1274 = vunpack.c.l.b16 %v1194
  %v1275 = vunpack.c.l.b16 %v1195
  %v1276 = vunpack.c.l.b16 %v1196
  %v1277 = vunpack.c.l.b16 %v1197
  %v1278 = vunpack.c.l.b16 %v1198
  %v1279 = vunpack.c.l.b16 %v1199
  %v1280 = vunpack.c.l.b16 %v1200
  %v1281 = vunpack.c.l.b16 %v1201
  %v1282 = vunpack.c.l.b16 %v1202
  %v1283 = vunpack.c.l.b16 %v1203
  %v1284 = vunpack.c.l.b16 %v1204
  %v1285 = vunpack.c.l.b16 %v1205
  %v1286 = vunpack.c.l.b16 %v1206
  %v1287 = vunpack.c.l.b16 %v1207
  %v1288 = vunpack.c.l.b16 %v1208
  %v1289 = vunpack.c.l.b16 %v1209
  %v1290 = vunpack.c.l.b16 %v1210
  %v1291 = vunpack.c.l.b16 %v1211
  %v1292 = vunpack.c.l.b16 %v1212
  %v1293 = vunpack.c.l.b16 %v1213
  %v1294 = vunpack.c.l.b16 %v1214
  %v1295 = vunpack.c.l.b16 %v1215
  %v1296 = vunpack.c.l.b16 %v1216
  %v1297 = vunpack.c.l.b16 %v1217
  %v1298 = vpack.c.b16 %v1267, %v1266
  %v1299 = vpack.c.b16 %v1269, %v1268
  %v1300 = vpack.c.b16 %v1271, %v1270
  %v1301 = vpack.c.b16 %v1273, %v1272
  %v1302 = vpack.c.b16 %v1275, %v1274
  %v1303 = vpack.c.b16 %v1277, %v1276
  %v1304 = vpack.c.b16 %v1279, %v1278
  %v1305 = vpack.c.b16 %v1281, %v1280
  %v1306 = vpack.c.b16 %v1283, %v1282
  %v1307 = vpack.c.b16 %v1285, %v1284
  %v1308 = vpack.c.b16 %v1287, %v1286
  %v1309 = vpack.c.b16 %v1289, %v1288
  %v1310 = vpack.c.b16 %v1291, %v1290
  %v1311 = vpack.c.b16 %v1293, %v1292
  %v1312 = vpack.c.b16 %v1295, %v1294
  %v1313 = vpack.c.b16 %v1297, %v1296
  %1330 = vmatprep.subr.bf16.mxu0 0
  %1331 = vmatpush1.bf16.msra.mxu0 %v1298
  %1332 = vmatprep.subr.bf16.mxu0 0
  %1333 = vmatpush1.bf16.msra.mxu0 %v1299
  %1334 = vmatprep.subr.bf16.mxu0 0
  %1335 = vmatpush1.bf16.msra.mxu0 %v1300
  %1336 = vmatprep.subr.bf16.mxu0 0
  %1337 = vmatpush1.bf16.msra.mxu0 %v1301
  %1338 = vmatprep.subr.bf16.mxu0 0
  %1339 = vmatpush1.bf16.msra.mxu0 %v1302
  %1340 = vmatprep.subr.bf16.mxu0 0
  %1341 = vmatpush1.bf16.msra.mxu0 %v1303
  %1342 = vmatprep.subr.bf16.mxu0 0
  %1343 = vmatpush1.bf16.msra.mxu0 %v1304
  %1344 = vmatprep.subr.bf16.mxu0 0
  %1345 = vmatpush1.bf16.msra.mxu0 %v1305
  %1346 = vmatprep.subr.bf16.mxu0 0
  %1347 = vmatpush1.bf16.msra.mxu0 %v1306
  %1348 = vmatprep.subr.bf16.mxu0 0
  %1349 = vmatpush1.bf16.msra.mxu0 %v1307
  %1350 = vmatprep.subr.bf16.mxu0 0
  %1351 = vmatpush1.bf16.msra.mxu0 %v1308
  %1352 = vmatprep.subr.bf16.mxu0 0
  %1353 = vmatpush1.bf16.msra.mxu0 %v1309
  %1354 = vmatprep.subr.bf16.mxu0 0
  %1355 = vmatpush1.bf16.msra.mxu0 %v1310
  %1356 = vmatprep.subr.bf16.mxu0 0
  %1357 = vmatpush1.bf16.msra.mxu0 %v1311
  %1358 = vmatprep.subr.bf16.mxu0 0
  %1359 = vmatpush1.bf16.msra.mxu0 %v1312
  %1360 = vmatprep.subr.bf16.mxu0 0
  %1361 = vmatpush1.bf16.msra.mxu0 %v1313
  %1362 = vmatprep.mubr.bf16.mxu0 %v1227
  %1363 = vmatmul.mubr.bf16.gmra.mrb[0].mxu0 %v1226
  %v1364 = vpop.f32.mrb[0].mxu0
  %v1365 = vadd.f32 0.0, %v1364
  %v1366 = vpop.f32.mrb[0].mxu0
  %v1367 = vpop.f32.mrb[0].mxu0
  %v1368 = vadd.f32 0.0, %v1367
  %v1369 = vpop.f32.mrb[0].mxu0
  %1370 = vmatprep.mubr.bf16.mxu0 %v1229
  %1371 = vmatmul.mubr.bf16.gmra.mrb[0].mxu0 %v1228
  %v1372 = vpop.f32.mrb[0].mxu0
  %v1373 = vadd.f32 0.0, %v1372
  %v1374 = vpop.f32.mrb[0].mxu0
  %v1375 = vpop.f32.mrb[0].mxu0
  %v1376 = vadd.f32 0.0, %v1375
  %v1377 = vpop.f32.mrb[0].mxu0
  %1378 = vdwg.mxu0
  %v1379 = vadd.f32 %v1127, %v1365
  %v1380 = vadd.f32 %v1128, %v1368
  %v1381 = vadd.f32 %v1129, %v1373
  %v1382 = vadd.f32 %v1130, %v1376
  %v1383 = vld [vmem:[#allocation2] sm:$0xee]
  %v1384 = vld [vmem:[#allocation2 + $0x18] sm:$0xee]
  %v1391 = vrot.slane %v1383, 5
  %v1392 = vrot.slane %v1391, 4
  %v1393 = vrot.slane %v1132, 5
  %v1394 = vsel %vm588, %v1392, %v1393
  %v1395 = vrot.slane %v1393, 4
  %v1396 = vrot.slane %v1133, 5
  %v1397 = vsel %vm588, %v1395, %v1396
  %v1398 = vrot.slane %v1384, 5
  %v1399 = vrot.slane %v1398, 4
  %v1400 = vrot.slane %v1135, 5
  %v1401 = vsel %vm588, %v1399, %v1400
  %v1402 = vrot.slane %v1400, 4
  %v1403 = vrot.slane %v1136, 5
  %v1404 = vsel %vm588, %v1402, %v1403
  %s1405 = scalar_lea.vmem %s3, 256
  %v1406 = vld [vmem:[%s1405] sm:$0xf]
  %v1407 = vld [vmem:[%s1405 + $0x4] sm:$0xf]
  %v1408 = vld [vmem:[%s1405 + $0x8] sm:$0xf]
  %v1409 = vld [vmem:[%s1405 + $0xc] sm:$0xf]
  %v1410 = vld [vmem:[%s1405 + $0x10] sm:$0xf]
  %v1411 = vld [vmem:[%s1405 + $0x14] sm:$0xf]
  %v1412 = vld [vmem:[%s1405 + $0x18] sm:$0xf]
  %v1413 = vld [vmem:[%s1405 + $0x1c] sm:$0xf]
  %v1414 = vld [vmem:[%s1405 + $0x20] sm:$0xf]
  %v1415 = vld [vmem:[%s1405 + $0x24] sm:$0xf]
  %v1416 = vld [vmem:[%s1405 + $0x28] sm:$0xf]
  %v1417 = vld [vmem:[%s1405 + $0x2c] sm:$0xf]
  %v1418 = vld [vmem:[%s1405 + $0x30] sm:$0xf]
  %v1419 = vld [vmem:[%s1405 + $0x34] sm:$0xf]
  %v1420 = vld [vmem:[%s1405 + $0x38] sm:$0xf]
  %v1421 = vld [vmem:[%s1405 + $0x3c] sm:$0xf]
  %v1422 = vld [vmem:[%s1405 + $0x40] sm:$0xf]
  %v1423 = vld [vmem:[%s1405 + $0x44] sm:$0xf]
  %v1424 = vld [vmem:[%s1405 + $0x48] sm:$0xf]
  %v1425 = vld [vmem:[%s1405 + $0x4c] sm:$0xf]
  %v1426 = vld [vmem:[%s1405 + $0x50] sm:$0xf]
  %v1427 = vld [vmem:[%s1405 + $0x54] sm:$0xf]
  %v1428 = vld [vmem:[%s1405 + $0x58] sm:$0xf]
  %v1429 = vld [vmem:[%s1405 + $0x5c] sm:$0xf]
  %v1430 = vld [vmem:[%s1405 + $0x60] sm:$0xf]
  %v1431 = vld [vmem:[%s1405 + $0x64] sm:$0xf]
  %v1432 = vld [vmem:[%s1405 + $0x68] sm:$0xf]
  %v1433 = vld [vmem:[%s1405 + $0x6c] sm:$0xf]
  %v1434 = vld [vmem:[%s1405 + $0x70] sm:$0xf]
  %v1435 = vld [vmem:[%s1405 + $0x74] sm:$0xf]
  %v1436 = vld [vmem:[%s1405 + $0x78] sm:$0xf]
  %v1437 = vld [vmem:[%s1405 + $0x7c] sm:$0xf]
  %v1438 = vunpack.c.l.b16 %v1394
  %v1439 = vunpack.c.h.b16 %v1394
  %v1440 = vunpack.c.l.b16 %v1397
  %v1441 = vunpack.c.h.b16 %v1397
  %v1442 = vunpack.c.l.b16 %v1401
  %v1443 = vunpack.c.h.b16 %v1401
  %v1444 = vunpack.c.l.b16 %v1404
  %v1445 = vunpack.c.h.b16 %v1404
  %v1446 = vpack.c.b16 %v1440, %v1438
  %v1447 = vpack.c.b16 %v1441, %v1439
  %v1448 = vpack.c.b16 %v1444, %v1442
  %v1449 = vpack.c.b16 %v1445, %v1443
  %v1486 = vunpack.c.l.b16 %v1406
  %v1487 = vunpack.c.l.b16 %v1407
  %v1488 = vunpack.c.l.b16 %v1408
  %v1489 = vunpack.c.l.b16 %v1409
  %v1490 = vunpack.c.l.b16 %v1410
  %v1491 = vunpack.c.l.b16 %v1411
  %v1492 = vunpack.c.l.b16 %v1412
  %v1493 = vunpack.c.l.b16 %v1413
  %v1494 = vunpack.c.l.b16 %v1414
  %v1495 = vunpack.c.l.b16 %v1415
  %v1496 = vunpack.c.l.b16 %v1416
  %v1497 = vunpack.c.l.b16 %v1417
  %v1498 = vunpack.c.l.b16 %v1418
  %v1499 = vunpack.c.l.b16 %v1419
  %v1500 = vunpack.c.l.b16 %v1420
  %v1501 = vunpack.c.l.b16 %v1421
  %v1502 = vunpack.c.l.b16 %v1422
  %v1503 = vunpack.c.l.b16 %v1423
  %v1504 = vunpack.c.l.b16 %v1424
  %v1505 = vunpack.c.l.b16 %v1425
  %v1506 = vunpack.c.l.b16 %v1426
  %v1507 = vunpack.c.l.b16 %v1427
  %v1508 = vunpack.c.l.b16 %v1428
  %v1509 = vunpack.c.l.b16 %v1429
  %v1510 = vunpack.c.l.b16 %v1430
  %v1511 = vunpack.c.l.b16 %v1431
  %v1512 = vunpack.c.l.b16 %v1432
  %v1513 = vunpack.c.l.b16 %v1433
  %v1514 = vunpack.c.l.b16 %v1434
  %v1515 = vunpack.c.l.b16 %v1435
  %v1516 = vunpack.c.l.b16 %v1436
  %v1517 = vunpack.c.l.b16 %v1437
  %v1518 = vpack.c.b16 %v1487, %v1486
  %v1519 = vpack.c.b16 %v1489, %v1488
  %v1520 = vpack.c.b16 %v1491, %v1490
  %v1521 = vpack.c.b16 %v1493, %v1492
  %v1522 = vpack.c.b16 %v1495, %v1494
  %v1523 = vpack.c.b16 %v1497, %v1496
  %v1524 = vpack.c.b16 %v1499, %v1498
  %v1525 = vpack.c.b16 %v1501, %v1500
  %v1526 = vpack.c.b16 %v1503, %v1502
  %v1527 = vpack.c.b16 %v1505, %v1504
  %v1528 = vpack.c.b16 %v1507, %v1506
  %v1529 = vpack.c.b16 %v1509, %v1508
  %v1530 = vpack.c.b16 %v1511, %v1510
  %v1531 = vpack.c.b16 %v1513, %v1512
  %v1532 = vpack.c.b16 %v1515, %v1514
  %v1533 = vpack.c.b16 %v1517, %v1516
  %1550 = vmatprep.subr.bf16.mxu0 0
  %1551 = vmatpush1.bf16.msra.mxu0 %v1518
  %1552 = vmatprep.subr.bf16.mxu0 0
  %1553 = vmatpush1.bf16.msra.mxu0 %v1519
  %1554 = vmatprep.subr.bf16.mxu0 0
  %1555 = vmatpush1.bf16.msra.mxu0 %v1520
  %1556 = vmatprep.subr.bf16.mxu0 0
  %1557 = vmatpush1.bf16.msra.mxu0 %v1521
  %1558 = vmatprep.subr.bf16.mxu0 0
  %1559 = vmatpush1.bf16.msra.mxu0 %v1522
  %1560 = vmatprep.subr.bf16.mxu0 0
  %1561 = vmatpush1.bf16.msra.mxu0 %v1523
  %1562 = vmatprep.subr.bf16.mxu0 0
  %1563 = vmatpush1.bf16.msra.mxu0 %v1524
  %1564 = vmatprep.subr.bf16.mxu0 0
  %1565 = vmatpush1.bf16.msra.mxu0 %v1525
  %1566 = vmatprep.subr.bf16.mxu0 0
  %1567 = vmatpush1.bf16.msra.mxu0 %v1526
  %1568 = vmatprep.subr.bf16.mxu0 0
  %1569 = vmatpush1.bf16.msra.mxu0 %v1527
  %1570 = vmatprep.subr.bf16.mxu0 0
  %1571 = vmatpush1.bf16.msra.mxu0 %v1528
  %1572 = vmatprep.subr.bf16.mxu0 0
  %1573 = vmatpush1.bf16.msra.mxu0 %v1529
  %1574 = vmatprep.subr.bf16.mxu0 0
  %1575 = vmatpush1.bf16.msra.mxu0 %v1530
  %1576 = vmatprep.subr.bf16.mxu0 0
  %1577 = vmatpush1.bf16.msra.mxu0 %v1531
  %1578 = vmatprep.subr.bf16.mxu0 0
  %1579 = vmatpush1.bf16.msra.mxu0 %v1532
  %1580 = vmatprep.subr.bf16.mxu0 0
  %1581 = vmatpush1.bf16.msra.mxu0 %v1533
  %1582 = vmatprep.mubr.bf16.mxu0 %v1447
  %1583 = vmatmul.mubr.bf16.gmra.mrb[0].mxu0 %v1446
  %v1584 = vpop.f32.mrb[0].mxu0
  %v1585 = vadd.f32 0.0, %v1584
  %v1586 = vpop.f32.mrb[0].mxu0
  %v1587 = vpop.f32.mrb[0].mxu0
  %v1588 = vadd.f32 0.0, %v1587
  %v1589 = vpop.f32.mrb[0].mxu0
  %1590 = vmatprep.mubr.bf16.mxu0 %v1449
  %1591 = vmatmul.mubr.bf16.gmra.mrb[0].mxu0 %v1448
  %v1592 = vpop.f32.mrb[0].mxu0
  %v1593 = vadd.f32 0.0, %v1592
  %v1594 = vpop.f32.mrb[0].mxu0
  %v1595 = vpop.f32.mrb[0].mxu0
  %v1596 = vadd.f32 0.0, %v1595
  %v1597 = vpop.f32.mrb[0].mxu0
  %1598 = vdwg.mxu0
  %v1599 = vadd.f32 %v1379, %v1585
  %v1600 = vadd.f32 %v1380, %v1588
  %v1601 = vadd.f32 %v1381, %v1593
  %v1602 = vadd.f32 %v1382, %v1596
  %1603 = vst [vmem:[%s5] sm:$0xff] %v1599
  %1604 = vst [vmem:[%s5 + $0x8] sm:$0xff] %v1600
  %1605 = vst [vmem:[%s5 + $0x10] sm:$0xff] %v1601
  %1606 = vst [vmem:[%s5 + $0x18] sm:$0xff] %v1602
  // Predicated region
  $region26: #{_forward.1} parent=0 // pred_check
    _
  $region27: #{_forward.1} parent=0 // pred_check_branch
    %1608 = sbr.rel (0) target = $region29
  $region28: #{_forward.1} parent=0 // pred_region
    _
  $region29: #{_forward.1} parent=0 // pred_fallthru
    _
  // Predicated region
  $region30: #{_forward.1} parent=0 // pred_check
    _
  $region31: #{_forward.1} parent=0 // pred_check_branch
    %1610 = sbr.rel (0) target = $region33
  $region32: #{_forward.1} parent=0 // pred_region
    _
  $region33: #{_forward.1} parent=0 // pred_fallthru
    _

</llo_original>
